<compile_context>
chip_gen: v5e
topology: v5e:2x2
jax: 0.10.0
libtpu: 0.0.40
codegen_flags: <defaults>
</compile_context>

<pallas_src>
import functools

import jax
import jax.numpy as jnp
from jax.experimental import pallas as pl
from jax.experimental.pallas import tpu as pltpu


def _round_up(x: int, m: int) -> int:
    return (x + m - 1) // m * m


def _pad2d(a, rows, cols):
    r, c = a.shape
    if r == rows and c == cols:
        return a
    return jnp.pad(a, ((0, rows - r), (0, cols - c)))


def _largest_divisor_tile(dim: int, cap: int, unit: int = 128) -> int:
    """Largest multiple of `unit` that divides `dim` and is <= cap (0 if none)."""
    best = 0
    t = unit
    hi = min(cap, dim)
    while t <= hi:
        if dim % t == 0:
            best = t
        t += unit
    return best


def _vmem_limit_bytes() -> int:
    """Per-generation VMEM limit: ~48 MiB on v7x (64 MiB phys), ~96 MiB on v5e/v6e."""
    try:
        cap = int(pltpu.get_tpu_info().vmem_capacity_bytes)
    except Exception:
        cap = 64 << 20  # conservative default (v7x)
    return max(32 << 20, min(cap * 3 // 4, 100 << 20))


def prepare_params(w_backbone, w_cls, b_cls):
    """One-time weight preparation (cast + lane padding).

    Call once at model-load time, NOT per forward step: padding/casting the multi-GB
    backbone weight inside the hot path would roughly double weight-related HBM traffic.
    """
    K, F = w_backbone.shape
    F2, C = w_cls.shape
    assert F == F2, "fc_cls in_features must match backbone num_features"
    K_pad = _round_up(K, 128)
    F_pad = _round_up(F, 128)
    C_pad = _round_up(C, 128)
    wb_p = _pad2d(jnp.asarray(w_backbone, jnp.bfloat16), K_pad, F_pad)   # streamed (bf16 halves HBM bytes)
    wc_p = _pad2d(jnp.asarray(w_cls, jnp.float32), F_pad, C_pad)         # tiny, kept f32 (PyTorch-fidelity)
    bc_p = _pad2d(jnp.asarray(b_cls, jnp.float32).reshape(1, C), 1, C_pad)
    return wb_p, wc_p, bc_p


def _video_classifier_kernel(x_ref, wb_ref, wc_ref, bc_ref, o_ref, emb_acc, *, num_splits):
    """One (reduction-split, batch-tile) program; K-tile axis is innermost."""
    k = pl.program_id(2)
    nk = pl.num_programs(2)

    @pl.when(k == 0)
    def _():
        emb_acc[...] = jnp.zeros_like(emb_acc)

    # Backbone GEMM tile: activations cast to bf16 in-kernel (VPU cast is free in this
    # HBM-bound regime), bf16 weights streamed from HBM, f32 accumulation on the MXU.
    emb_acc[...] += jnp.dot(x_ref[...].astype(jnp.bfloat16), wb_ref[...],
                            preferred_element_type=jnp.float32)

    # Fused fc_cls epilogue once this split's K reduction is complete.  The classifier
    # runs in f32 (embedding never squeezed through bf16, never written to HBM).
    @pl.when(k == nk - 1)
    def _():
        logits = jnp.dot(emb_acc[...], wc_ref[...], preferred_element_type=jnp.float32)
        # Each reduction split adds 1/num_splits of the bias so the wrapper-side
        # partial sum contributes exactly one bias (exact for num_splits in {1, 2}).
        logits = logits + bc_ref[...] * (1.0 / num_splits)
        o_ref[...] = logits[None].astype(o_ref.dtype)


@functools.partial(jax.jit, static_argnames=("num_classes",))
def video_classifier_forward(video, wb_p, wc_p, bc_p, *, num_classes):
    """Fused VideoClassifier forward.

    video: (B, C, T, H, W), streamed in its stored dtype (cast to bf16 in-kernel)
    wb_p:  (K_pad, F_pad) bf16   -- from prepare_params (stand-in backbone projection)
    wc_p:  (F_pad, C_pad) f32    -- fc_cls weight
    bc_p:  (1, C_pad) f32        -- fc_cls bias
    returns (B, num_classes) float32 logits
    """
    B = video.shape[0]
    K = 1
    for d in video.shape[1:]:
        K *= d
    K_pad, F_pad = wb_p.shape
    C_pad = wc_p.shape[1]

    # NCTHW flatten: contiguous row-major reshape (layout-free).
    x = video.reshape(B, K)
    x_bytes = jnp.dtype(video.dtype).itemsize

    # ---- Batch tiling: keep tm == B (no batch pad, no x copy) for inference batches.
    if B <= 512:
        tm, B_pad = B, B
    else:
        tm = 256
        B_pad = _round_up(B, tm)

    # ---- K tiling: as large as the VMEM budget allows (fewer grid steps, longer DMAs
    # for the dominant wb stream), chosen as an exact divisor of K_pad so the video and
    # backbone weight need no extra padding.
    vmem_limit = _vmem_limit_bytes()
    budget = vmem_limit - (8 << 20)                       # headroom for compiler scratch
    fixed = (2 * F_pad * C_pad * 4 + 2 * C_pad * 4        # resident fc_cls weight + bias
             + tm * F_pad * 4 + 2 * tm * C_pad * 4)       # emb accumulator + out block
    per_k = 2 * tm * x_bytes + 4 * F_pad                  # double-buffered x + bf16 wb per K elem
    tk_cap = max(128, (budget - fixed) // per_k // 128 * 128)
    tk_cap = min(tk_cap, 16384, K_pad)
    tk = _largest_divisor_tile(K_pad, tk_cap)
    if tk == 0:                                           # unreachable: K_pad is a multiple of 128
        tk = min(tk_cap, K_pad)
    nk_total = K_pad // tk
    b_tiles = B_pad // tm

    # ---- v7x megacore: with a single batch tile the only parallel axis would have
    # extent 1 and the second TensorCore would idle.  Split the K reduction across a
    # leading parallel axis (each core streams half of x/wb -> no duplicated HBM
    # traffic) and sum the two partial-logit slabs in the wrapper.  Harmless on
    # single-TC chips (one extra tiny output block + one add).
    if b_tiles == 1 and nk_total == 1 and tk % 256 == 0:
        tk //= 2
        nk_total = 2
    nc = 2 if (b_tiles == 1 and nk_total % 2 == 0) else 1
    nk = nk_total // nc

    if (B_pad, K_pad) != (B, K):
        # TODO(synk): only hit when K % 128 != 0 or B > 512; could mask the remainder
        # in-kernel instead of materializing a padded copy of x.
        x = _pad2d(x, B_pad, K_pad)

    kernel = functools.partial(_video_classifier_kernel, num_splits=nc)

    out = pl.pallas_call(
        kernel,
        out_shape=jax.ShapeDtypeStruct((nc, B_pad, C_pad), jnp.float32),
        grid_spec=pltpu.PrefetchScalarGridSpec(
            num_scalar_prefetch=0,
            grid=(nc, b_tiles, nk),
            in_specs=[
                pl.BlockSpec((tm, tk), lambda c, i, k: (i, c * nk + k)),     # video (stored dtype, streamed)
                pl.BlockSpec((tk, F_pad), lambda c, i, k: (c * nk + k, 0)),  # backbone weight (bf16, streamed)
                pl.BlockSpec((F_pad, C_pad), lambda c, i, k: (0, 0)),        # fc_cls weight (VMEM resident)
                pl.BlockSpec((1, C_pad), lambda c, i, k: (0, 0)),            # fc_cls bias
            ],
            out_specs=pl.BlockSpec((1, tm, C_pad), lambda c, i, k: (c, i, 0)),
            scratch_shapes=[pltpu.VMEM((tm, F_pad), jnp.float32)],           # f32 embedding accumulator
        ),
        compiler_params=pltpu.CompilerParams(
            dimension_semantics=("parallel", "parallel", "arbitrary"),
            vmem_limit_bytes=vmem_limit,
        ),
        cost_estimate=pl.CostEstimate(
            flops=2 * B_pad * K_pad * F_pad + 2 * B_pad * F_pad * C_pad * nc,
            transcendentals=0,
            bytes_accessed=(x.size * x_bytes + wb_p.size * 2 + wc_p.size * 4
                            + bc_p.size * 4 + nc * B_pad * C_pad * 4),
        ),
    )(x, wb_p, wc_p, bc_p)

    logits = out.sum(axis=0) if nc > 1 else out[0]
    return logits[:B, :num_classes]


if __name__ == "__main__":
    key = jax.random.PRNGKey(0)
    kx, kb, kc, kd = jax.random.split(key, 4)

    # Small deterministic shapes: B=2, C=4, T=8, H=W=16 -> K = 8192; F=32, classes=10.
    B, Cc, T, H, W = 2, 4, 8, 16, 16
    num_features, num_classes = 32, 10
    K = Cc * T * H * W

    video = jax.random.normal(kx, (B, Cc, T, H, W), dtype=jnp.float32)
    w_backbone = jax.random.normal(kb, (K, num_features), dtype=jnp.float32) * 0.02
    # fc_cls init as in the PyTorch module is N(0, 0.01) weight / zero bias; a small
    # nonzero bias is used here to exercise the fused bias path.
    w_cls = jax.random.normal(kc, (num_features, num_classes), dtype=jnp.float32) * 0.01
    b_cls = jax.random.normal(kd, (num_classes,), dtype=jnp.float32) * 0.01

    # One-time weight prep (outside the jitted hot path).
    wb_p, wc_p, bc_p = prepare_params(w_backbone, w_cls, b_cls)

    logits = video_classifier_forward(video, wb_p, wc_p, bc_p, num_classes=num_classes)
    logits = jax.block_until_ready(logits)
    assert logits.shape == (B, num_classes)

    # Pure-JAX reference: backbone GEMM with the same bf16 inputs / f32 accumulation,
    # classifier in f32 (matches the kernel's f32 epilogue).
    x_r = video.reshape(B, K)
    emb_r = jnp.dot(x_r.astype(jnp.bfloat16).astype(jnp.float32),
                    w_backbone.astype(jnp.bfloat16).astype(jnp.float32))
    logits_ref = jnp.dot(emb_r, w_cls) + b_cls

    err = float(jnp.max(jnp.abs(logits - logits_ref)))
    scale = float(jnp.max(jnp.abs(logits_ref))) + 1e-6
    if not (err / scale < 5e-2):
        raise AssertionError(f"kernel/reference mismatch: max abs err {err} (scale {scale})")

    print("KERNEL_OK")
</pallas_src>

<mosaic_0001>
module attributes {stable_mosaic.version = 11 : i64} {
  func.func @_video_classifier_kernel(%arg0: i32, %arg1: i32, %arg2: i32, %arg3: memref<2x4096xf32, #tpu.memory_space<vmem>>, %arg4: memref<4096x128xbf16, #tpu.memory_space<vmem>>, %arg5: memref<128x128xf32, #tpu.memory_space<vmem>>, %arg6: memref<1x128xf32, #tpu.memory_space<vmem>>, %arg7: memref<1x2x128xf32, #tpu.memory_space<vmem>>, %arg8: memref<2x128xf32, #tpu.memory_space<vmem>>) attributes {dimension_semantics = [#tpu.dimension_semantics<parallel>, #tpu.dimension_semantics<parallel>, #tpu.dimension_semantics<arbitrary>], iteration_bounds = array<i64: 2, 1, 1>, scalar_prefetch = 0 : i64, scratch_operands = 1 : i64, tpu.core_type = #tpu.core_type<tc>, window_params = [{transform_indices = @transform_0, window_bounds = array<i64: 2, 4096>}, {transform_indices = @transform_1, window_bounds = array<i64: 4096, 128>}, {pipeline_mode = #tpu.pipeline_mode<synchronous>, transform_indices = @transform_2, window_bounds = array<i64: 128, 128>}, {pipeline_mode = #tpu.pipeline_mode<synchronous>, transform_indices = @transform_3, window_bounds = array<i64: 1, 128>}, {transform_indices = @transform_4, window_bounds = array<i64: 1, 2, 128>}]} {
    %c0_i32 = arith.constant 0 : i32
    %0 = arith.cmpi eq, %arg2, %c0_i32 : i32
    %1 = arith.extui %0 : i1 to i32
    %c0_i32_0 = arith.constant 0 : i32
    %2 = arith.cmpi ne, %1, %c0_i32_0 : i32
    scf.if %2 {
      %cst_10 = arith.constant 0.000000e+00 : f32
      %13 = vector.broadcast %cst_10 : f32 to vector<2x128xf32>
      %c0_11 = arith.constant 0 : index
      %c0_12 = arith.constant 0 : index
      %14 = vector.load %arg8[%c0_11, %c0_12] : memref<2x128xf32, #tpu.memory_space<vmem>>, vector<2x128xf32>
      tpu.vector_store %arg8[%c0_11, %c0_12], %13 {strides = array<i32>} : memref<2x128xf32, #tpu.memory_space<vmem>>, vector<2x128xf32>,
    } else {
    }
    %c0 = arith.constant 0 : index
    %c0_1 = arith.constant 0 : index
    %3 = vector.load %arg8[%c0, %c0_1] : memref<2x128xf32, #tpu.memory_space<vmem>>, vector<2x128xf32>
    %c0_2 = arith.constant 0 : index
    %c0_3 = arith.constant 0 : index
    %4 = vector.load %arg3[%c0_2, %c0_3] : memref<2x4096xf32, #tpu.memory_space<vmem>>, vector<2x4096xf32>
    %5 = arith.truncf %4 : vector<2x4096xf32> to vector<2x4096xbf16>
    %c0_4 = arith.constant 0 : index
    %c0_5 = arith.constant 0 : index
    %6 = vector.load %arg4[%c0_4, %c0_5] : memref<4096x128xbf16, #tpu.memory_space<vmem>>, vector<4096x128xbf16>
    %cst = arith.constant dense<0.000000e+00> : vector<2x128xf32>
    %7 = tpu.matmul %5, %6, %cst {dimension_numbers = #tpu.dot_dimension_numbers<[1], [0], [0], [1], [0, 0, 1, 1], [], []>} : vector<2x4096xbf16>, vector<4096x128xbf16>, vector<2x128xf32> -> vector<2x128xf32>
    %8 = arith.addf %3, %7 : vector<2x128xf32>
    %c0_6 = arith.constant 0 : index
    %c0_7 = arith.constant 0 : index
    %9 = vector.load %arg8[%c0_6, %c0_7] : memref<2x128xf32, #tpu.memory_space<vmem>>, vector<2x128xf32>
    tpu.vector_store %arg8[%c0_6, %c0_7], %8 {strides = array<i32>} : memref<2x128xf32, #tpu.memory_space<vmem>>, vector<2x128xf32>,
    %c0_i32_8 = arith.constant 0 : i32
    %10 = arith.cmpi eq, %arg2, %c0_i32_8 : i32
    %11 = arith.extui %10 : i1 to i32
    %c0_i32_9 = arith.constant 0 : i32
    %12 = arith.cmpi ne, %11, %c0_i32_9 : i32
    scf.if %12 {
      %c0_10 = arith.constant 0 : index
      %c0_11 = arith.constant 0 : index
      %13 = vector.load %arg8[%c0_10, %c0_11] : memref<2x128xf32, #tpu.memory_space<vmem>>, vector<2x128xf32>
      %c0_12 = arith.constant 0 : index
      %c0_13 = arith.constant 0 : index
      %14 = vector.load %arg5[%c0_12, %c0_13] : memref<128x128xf32, #tpu.memory_space<vmem>>, vector<128x128xf32>
      %cst_14 = arith.constant dense<0.000000e+00> : vector<2x128xf32>
      %15 = tpu.matmul %13, %14, %cst_14 {dimension_numbers = #tpu.dot_dimension_numbers<[1], [0], [0], [1], [0, 0, 1, 1], [], []>} : vector<2x128xf32>, vector<128x128xf32>, vector<2x128xf32> -> vector<2x128xf32>
      %c0_15 = arith.constant 0 : index
      %c0_16 = arith.constant 0 : index
      %16 = vector.load %arg6[%c0_15, %c0_16] : memref<1x128xf32, #tpu.memory_space<vmem>>, vector<1x128xf32>
      %cst_17 = arith.constant 5.000000e-01 : f32
      %17 = vector.broadcast %cst_17 : f32 to vector<1x128xf32>
      %18 = arith.mulf %16, %17 : vector<1x128xf32>
      %19 = vector.broadcast %18 : vector<1x128xf32> to vector<2x128xf32>
      %20 = arith.addf %15, %19 : vector<2x128xf32>
      %21 = vector.shape_cast %20 : vector<2x128xf32> to vector<1x2x128xf32>
      %c0_18 = arith.constant 0 : index
      %c0_19 = arith.constant 0 : index
      %c0_20 = arith.constant 0 : index
      %22 = vector.load %arg7[%c0_18, %c0_19, %c0_20] : memref<1x2x128xf32, #tpu.memory_space<vmem>>, vector<1x2x128xf32>
      tpu.vector_store %arg7[%c0_18, %c0_19, %c0_20], %21 {strides = array<i32>} : memref<1x2x128xf32, #tpu.memory_space<vmem>>, vector<1x2x128xf32>,
    } else {
    }
    return
  }
  func.func @transform_0(%arg0: i32, %arg1: i32, %arg2: i32) -> (i32, i32) {
    %c1_i32 = arith.constant 1 : i32
    %0 = arith.muli %arg0, %c1_i32 : i32
    %1 = arith.addi %0, %arg2 : i32
    %c0_i32 = arith.constant 0 : i32
    return %arg1, %1 : i32, i32
  }
  func.func @transform_1(%arg0: i32, %arg1: i32, %arg2: i32) -> (i32, i32) {
    %c1_i32 = arith.constant 1 : i32
    %0 = arith.muli %arg0, %c1_i32 : i32
    %1 = arith.addi %0, %arg2 : i32
    %c0_i32 = arith.constant 0 : i32
    %c0_i32_0 = arith.constant 0 : i32
    return %1, %c0_i32 : i32, i32
  }
  func.func @transform_2(%arg0: i32, %arg1: i32, %arg2: i32) -> (i32, i32) {
    %c0_i32 = arith.constant 0 : i32
    %c0_i32_0 = arith.constant 0 : i32
    %c0_i32_1 = arith.constant 0 : i32
    return %c0_i32, %c0_i32_0 : i32, i32
  }
  func.func @transform_3(%arg0: i32, %arg1: i32, %arg2: i32) -> (i32, i32) {
    %c0_i32 = arith.constant 0 : i32
    %c0_i32_0 = arith.constant 0 : i32
    %c0_i32_1 = arith.constant 0 : i32
    return %c0_i32, %c0_i32_0 : i32, i32
  }
  func.func @transform_4(%arg0: i32, %arg1: i32, %arg2: i32) -> (i32, i32, i32) {
    %c0_i32 = arith.constant 0 : i32
    %c0_i32_0 = arith.constant 0 : i32
    return %arg0, %arg1, %c0_i32 : i32, i32, i32
  }
}

</mosaic_0001>

<llo_original>
// kernel: video_classifier_forward.1
$region0: #{video_classifier_forward.1}
  #allocation0 [shape = 'u32[]', space=smem, size = 0x4, offset = 0x4, fixed_abs, tag = 'smem constant byte address 0x4 - core index']
  #allocation1 [shape = 'u32[72,128]{1,0:T(1,128)}', space=vmem, size = 0x9000, scoped, tag = 'internal scratch']
  #allocation2 [shape = 'f32[2,128]{1,0:T(2,128)}', space=vmem, size = 0x400, scoped, tag = 'scratch operand']
  %s0 = inlined_call_operand.vmem [shape: f32[2,8192], index: 0, kind: input, shape index: {}]
  %s1 = inlined_call_operand.hbm [shape: bf16[8192,128], index: 1, kind: input, shape index: {}]
  %s2 = inlined_call_operand.hbm [shape: f32[128,128], index: 2, kind: input, shape index: {}]
  %s3 = inlined_call_operand.hbm [shape: f32[1,128], index: 3, kind: input, shape index: {}]
  %s4 = inlined_call_operand.vmem [shape: f32[2,2,128], index: 4, kind: output, shape index: {}]
  %s5 = sld [smem:[#allocation0]]
  $region69: #{video_classifier_forward.1} parent=0
    _
  %s7 = ssub.s32 1, %s5
  %s8 = scalar_select 0, %s7, %s5
  $region1: #{video_classifier_forward.1} parent=0
    #allocation3 [shape = 'u8[2097152]{0}', space=vmem, size = 0x200000, scoped, tag = 'input window, operand 1']
    #allocation4 [shape = 's32[2]{0}', space=sflag, size = 0x8, scoped, tag = 'scoped memory for video_classifier_forward.1']
    #allocation5 [shape = 'u8[65536]{0}', space=vmem, size = 0x10000, scoped, tag = 'input window, operand 2, single buffered']
    #allocation6 [shape = 's32[1]{0}', space=sflag, size = 0x4, scoped, tag = 'scoped memory for video_classifier_forward.1']
    #allocation7 [shape = 'u8[512]{0}', space=vmem, size = 0x400, scoped, tag = 'input window, operand 3, single buffered']
    %9 = vsyncpa [#allocation4], 0
    %s10 = scalar_lea.sflag [#allocation4], 1
    %11 = vsyncpa %s10, 0
    %12 = vsyncpa [#allocation6], 0
    loop: start=0, step=1, limit=4
    $region2: #{video_classifier_forward.1} parent=1 // loop_pre_header
      _
    $region3: #{video_classifier_forward.1} parent=1 // loop_header
      %s14 = sphi 0, %s18
      %p15 = scmp.ge.s32.totalorder %s14, 4
      %s21 = sphi 0, %s40
      %s22 = sphi 0, %s36
      %s23 = sphi 0, %s32
      %s24 = sphi 0, %s21
      %s25 = sphi 0, %s22
      %s26 = sphi 0, %s23
      %s27 = sphi 0, %s24
      %s28 = sphi 0, %s25
      %s29 = sphi 0, %s26
      %s47 = sphi 0, %s49
      %s50 = sphi 0, %s47
      %s51 = sphi 0, %s50
      %s67 = sphi 0, %s51
      %s75 = sphi 0, %s77
      %s78 = sphi 0, %s75
      %s79 = sphi 0, %s78
      %s95 = sphi 0, %s79
      %s99 = sphi 0, %s99
      %s101 = sphi 0, %s99
      %s102 = sphi 0, %s101
      %s116 = sphi 0, %s102
      %s120 = sphi 0, %s120
      %s122 = sphi 0, %s120
      %s123 = sphi 0, %s122
      %s137 = sphi 0, %s123
      %s145 = sphi 0, %s147
      %s148 = sphi 0, %s145
      %s149 = sphi 0, %s148
      %s165 = sphi 0, %s149
    $region4: #{video_classifier_forward.1} parent=1 // loop_header_branch
      %17 = sbr.rel (%p15) target = $region8
    $region5: #{video_classifier_forward.1} parent=1 // loop_body
      %s19 = ssub.s32 %s14, 1
      %s20 = ssub.s32 %s14, 2
      %s30 = sadd.s32 1, %s23
      %p31 = scmp.ge.s32.totalorder %s30, 1
      %s32 = scalar_select %p31, 0, %s30
      %s33 = sadd.s32 1, %s22
      %s34 = scalar_select %p31, %s33, %s22
      %p35 = scmp.ge.s32.totalorder %s34, 1
      %s36 = scalar_select %p35, 0, %s34
      %s37 = sadd.s32 1, %s21
      %s38 = scalar_select %p35, %s37, %s21
      %p39 = scmp.ge.s32.totalorder %s38, 2
      %s40 = scalar_select %p39, 0, %s38
      %s41 = sadd.s32 %s21, %s23
      %s42 = sadd.s32 %s40, %s32
      %s43 = ssub.s32 %s22, %s36
      %s44 = ssub.s32 %s41, %s42
      %s45 = sor.u32 %s43, %s44
      %p46 = scmp.eq.s32.totalorder %s45, 0
      %s48 = sadd.s32 %s47, 1
      %s49 = scalar_select %p46, %s47, %s48
      %p52 = pneg %p46
      %p53 = scmp.eq.s32.totalorder %s14, 1
      %p54 = por %p52, %p53
      %p55 = scmp.ne.s32.totalorder %s47, %s50
      %p56 = scmp.eq.s32.totalorder %s14, 0
      %p57 = por %p55, %p56
      %p58 = scmp.ne.s32.totalorder %s47, %s50
      %p59 = scmp.eq.s32.totalorder %s19, 1
      %p60 = por %p58, %p59
      %p61 = scmp.ne.s32.totalorder %s50, %s51
      %p62 = scmp.eq.s32.totalorder %s19, 0
      %p63 = por %p61, %p62
      %p64 = scmp.ne.s32.totalorder %s50, %s51
      %p65 = scmp.eq.s32.totalorder %s20, 1
      %p66 = por %p64, %p65
      %p68 = scmp.ne.s32.totalorder %s51, %s67
      %p69 = scmp.eq.s32.totalorder %s20, 0
      %p70 = por %p68, %p69
      %s71 = sadd.s32 %s21, %s23
      %s72 = sadd.s32 %s40, %s32
      %s73 = ssub.s32 %s71, %s72
      %p74 = scmp.eq.s32.totalorder %s73, 0
      %s76 = sadd.s32 %s75, 1
      %s77 = scalar_select %p74, %s75, %s76
      %p80 = pneg %p74
      %p81 = scmp.eq.s32.totalorder %s14, 1
      %p82 = por %p80, %p81
      %p83 = scmp.ne.s32.totalorder %s75, %s78
      %p84 = scmp.eq.s32.totalorder %s14, 0
      %p85 = por %p83, %p84
      %p86 = scmp.ne.s32.totalorder %s75, %s78
      %p87 = scmp.eq.s32.totalorder %s19, 1
      %p88 = por %p86, %p87
      %p89 = scmp.ne.s32.totalorder %s78, %s79
      %p90 = scmp.eq.s32.totalorder %s19, 0
      %p91 = por %p89, %p90
      %p92 = scmp.ne.s32.totalorder %s78, %s79
      %p93 = scmp.eq.s32.totalorder %s20, 1
      %p94 = por %p92, %p93
      %p96 = scmp.ne.s32.totalorder %s79, %s95
      %p97 = scmp.eq.s32.totalorder %s20, 0
      %p98 = por %p96, %p97
      %s100 = sadd.s32 %s99, 1
      %p103 = scmp.eq.s32.totalorder %s14, 1
      %p104 = scmp.ne.s32.totalorder %s99, %s101
      %p105 = scmp.eq.s32.totalorder %s14, 0
      %p106 = por %p104, %p105
      %p107 = scmp.ne.s32.totalorder %s99, %s101
      %p108 = scmp.eq.s32.totalorder %s19, 1
      %p109 = por %p107, %p108
      %p110 = scmp.ne.s32.totalorder %s101, %s102
      %p111 = scmp.eq.s32.totalorder %s19, 0
      %p112 = por %p110, %p111
      %p113 = scmp.ne.s32.totalorder %s101, %s102
      %p114 = scmp.eq.s32.totalorder %s20, 1
      %p115 = por %p113, %p114
      %p117 = scmp.ne.s32.totalorder %s102, %s116
      %p118 = scmp.eq.s32.totalorder %s20, 0
      %p119 = por %p117, %p118
      %s121 = sadd.s32 %s120, 1
      %p124 = scmp.eq.s32.totalorder %s14, 1
      %p125 = scmp.ne.s32.totalorder %s120, %s122
      %p126 = scmp.eq.s32.totalorder %s14, 0
      %p127 = por %p125, %p126
      %p128 = scmp.ne.s32.totalorder %s120, %s122
      %p129 = scmp.eq.s32.totalorder %s19, 1
      %p130 = por %p128, %p129
      %p131 = scmp.ne.s32.totalorder %s122, %s123
      %p132 = scmp.eq.s32.totalorder %s19, 0
      %p133 = por %p131, %p132
      %p134 = scmp.ne.s32.totalorder %s122, %s123
      %p135 = scmp.eq.s32.totalorder %s20, 1
      %p136 = por %p134, %p135
      %p138 = scmp.ne.s32.totalorder %s123, %s137
      %p139 = scmp.eq.s32.totalorder %s20, 0
      %p140 = por %p138, %p139
      %s141 = ssub.s32 %s21, %s40
      %s142 = ssub.s32 %s22, %s36
      %s143 = sor.u32 %s141, %s142
      %p144 = scmp.eq.s32.totalorder %s143, 0
      %s146 = sadd.s32 %s145, 1
      %s147 = scalar_select %p144, %s145, %s146
      %p150 = pneg %p144
      %p151 = scmp.eq.s32.totalorder %s14, 1
      %p152 = por %p150, %p151
      %p153 = scmp.ne.s32.totalorder %s145, %s148
      %p154 = scmp.eq.s32.totalorder %s14, 0
      %p155 = por %p153, %p154
      %p156 = scmp.ne.s32.totalorder %s145, %s148
      %p157 = scmp.eq.s32.totalorder %s19, 1
      %p158 = por %p156, %p157
      %p159 = scmp.ne.s32.totalorder %s148, %s149
      %p160 = scmp.eq.s32.totalorder %s19, 0
      %p161 = por %p159, %p160
      %p162 = scmp.ne.s32.totalorder %s148, %s149
      %p163 = scmp.eq.s32.totalorder %s20, 1
      %p164 = por %p162, %p163
      %p166 = scmp.ne.s32.totalorder %s149, %s165
      %p167 = scmp.eq.s32.totalorder %s20, 0
      %p168 = por %p166, %p167
      %p169 = scmp.le.s32.totalorder 1, %s14
      %p170 = scmp.lt.s32.totalorder %s14, 3
      %p171 = pnand %p169, %p170
      %p172 = pneg %p171
      // Predicated region
      $region9: #{video_classifier_forward.1} parent=5 // pred_check
        _
      $region10: #{video_classifier_forward.1} parent=5 // pred_check_branch
        %174 = sbr.rel (%p171) target = $region12
      $region11: #{video_classifier_forward.1} parent=5 // pred_region
        %s175 = ssub.s32 %s14, 1
        // Predicated region
        $region13: #{video_classifier_forward.1} parent=11 // pred_check
          %p176 = pneg %p112
        $region14: #{video_classifier_forward.1} parent=11 // pred_check_branch
          %178 = sbr.rel (%p176) target = $region16
        $region15: #{video_classifier_forward.1} parent=11 // pred_region
          %180 = vsyncadd [#allocation6], 0
          %s181 = sshll.u32 %s2, 4
          %s182 = int_to_ptr.hbm [resolvable:$true] %s181
          %s183 = sshll.u32 [#allocation5], 4
          %s184 = int_to_ptr.vmem [resolvable:$true] %s183
          %189 = dma.hbm_to_vmem [thread:$0]  %s182, 2048, %s184, [#allocation6], 128, 128, 8
        $region16: #{video_classifier_forward.1} parent=11 // pred_fallthru
          _
        // Predicated region
        $region17: #{video_classifier_forward.1} parent=11 // pred_check
          %p190 = pneg %p133
        $region18: #{video_classifier_forward.1} parent=11 // pred_check_branch
          %192 = sbr.rel (%p190) target = $region20
        $region19: #{video_classifier_forward.1} parent=11 // pred_region
          %194 = vsyncadd [#allocation6], 0
          %s196 = sshll.u32 %s3, 4
          %s197 = int_to_ptr.hbm [resolvable:$true] %s196
          %s198 = sshll.u32 [#allocation7], 4
          %s199 = int_to_ptr.vmem [resolvable:$true] %s198
          %201 = dma.hbm_to_vmem [thread:$0]  %s197, 16, %s199, [#allocation6]
        $region20: #{video_classifier_forward.1} parent=11 // pred_fallthru
          _
      $region12: #{video_classifier_forward.1} parent=5 // pred_fallthru
        _
      %p202 = scmp.lt.s32.totalorder %s14, 2
      // Predicated region
      $region21: #{video_classifier_forward.1} parent=5 // pred_check
        %p203 = pneg %p202
      $region22: #{video_classifier_forward.1} parent=5 // pred_check_branch
        %205 = sbr.rel (%p203) target = $region24
      $region23: #{video_classifier_forward.1} parent=5 // pred_region
        // Predicated region
        $region25: #{video_classifier_forward.1} parent=23 // pred_check
          %p206 = pneg %p57
        $region26: #{video_classifier_forward.1} parent=23 // pred_check_branch
          %208 = sbr.rel (%p206) target = $region28
        $region27: #{video_classifier_forward.1} parent=23 // pred_region
          %s209 = sadd.s32 %s21, %s23
          %s210 = smul.u32 32, %s209
          %p211 = scmp.lt.s32.totalorder %s22, 0
          %s212 = scalar_select %p211, %s22, 0
          %p213 = scmp.lt.s32.totalorder %s210, 63
          %s214 = scalar_select %p213, %s210, 63
          %s215 = smul.addr %s212, 64
          %s216 = sadd.s32 %s214, %s215
          %s217 = smul.addr %s216, 2
          %s218 = scalar_lea.vmem %s0, %s217
          %s219 = sadd.s32 %s21, %s23
          %s220 = smul.u32 32, %s219
        $region28: #{video_classifier_forward.1} parent=23 // pred_fallthru
          _
        // Predicated region
        $region29: #{video_classifier_forward.1} parent=23 // pred_check
          %p221 = pneg %p85
        $region30: #{video_classifier_forward.1} parent=23 // pred_check_branch
          %223 = sbr.rel (%p221) target = $region32
        $region31: #{video_classifier_forward.1} parent=23 // pred_region
          %s224 = sand.u32 %s75, 1
          %s225 = scalar_lea.sflag [#allocation4], %s224
          %s226 = sand.u32 %s75, 1
          %s227 = smul.addr %s226, 2048
          %s228 = scalar_lea.vmem [#allocation3], %s227
          %s229 = sadd.s32 %s21, %s23
          %s230 = smul.u32 512, %s229
          %232 = vsyncadd %s225, 0
          %s233 = smul.addr %s230, 4
          %s234 = scalar_lea.hbm %s1, %s233
          %s235 = sshll.u32 %s234, 4
          %s236 = int_to_ptr.hbm [resolvable:$true] %s235
          %s237 = sshll.u32 %s228, 4
          %s238 = int_to_ptr.vmem [resolvable:$true] %s237
          %243 = dma.hbm_to_vmem [thread:$0]  %s236, 32768, %s238, %s225, 64, 64, 4
        $region32: #{video_classifier_forward.1} parent=23 // pred_fallthru
          _
      $region24: #{video_classifier_forward.1} parent=5 // pred_fallthru
        _
      %p244 = scmp.le.s32.totalorder 1, %s14
      %p245 = scmp.lt.s32.totalorder %s14, 3
      %p246 = pnand %p244, %p245
      %p247 = pneg %p246
      // Predicated region
      $region33: #{video_classifier_forward.1} parent=5 // pred_check
        _
      $region34: #{video_classifier_forward.1} parent=5 // pred_check_branch
        %249 = sbr.rel (%p246) target = $region36
      $region35: #{video_classifier_forward.1} parent=5 // pred_region
        %s250 = ssub.s32 %s14, 1
        %s251 = sand.u32 %s78, 1
        %s252 = scalar_lea.sflag [#allocation4], %s251
        %s253 = sand.u32 %s78, 1
        %s254 = smul.addr %s253, 2048
        %s255 = scalar_lea.vmem [#allocation3], %s254
        // Predicated region
        $region37: #{video_classifier_forward.1} parent=35 // pred_check
          %p256 = pneg %p91
        $region38: #{video_classifier_forward.1} parent=35 // pred_check_branch
          %258 = sbr.rel (%p256) target = $region40
        $region39: #{video_classifier_forward.1} parent=35 // pred_region
          %260 = dma.done %s252, 32768
        $region40: #{video_classifier_forward.1} parent=35 // pred_fallthru
          _
        // Predicated region
        $region41: #{video_classifier_forward.1} parent=35 // pred_check
          %p261 = pneg %p112
        $region42: #{video_classifier_forward.1} parent=35 // pred_check_branch
          %263 = sbr.rel (%p261) target = $region44
        $region43: #{video_classifier_forward.1} parent=35 // pred_region
          %265 = dma.done [#allocation6], 2048
        $region44: #{video_classifier_forward.1} parent=35 // pred_fallthru
          _
        // Predicated region
        $region45: #{video_classifier_forward.1} parent=35 // pred_check
          %p266 = pneg %p133
        $region46: #{video_classifier_forward.1} parent=35 // pred_check_branch
          %268 = sbr.rel (%p266) target = $region48
        $region47: #{video_classifier_forward.1} parent=35 // pred_region
          %270 = dma.done [#allocation6], 16
        $region48: #{video_classifier_forward.1} parent=35 // pred_fallthru
          _
        %s271 = sadd.s32 %s24, %s26
        %s272 = smul.u32 32, %s271
        %p273 = scmp.lt.s32.totalorder %s25, 0
        %s274 = scalar_select %p273, %s25, 0
        %p275 = scmp.lt.s32.totalorder %s272, 63
        %s276 = scalar_select %p275, %s272, 63
        %s277 = smul.addr %s274, 64
        %s278 = sadd.s32 %s276, %s277
        %s279 = smul.addr %s278, 2
        %s280 = scalar_lea.vmem %s0, %s279
        %p281 = pneg %p63
        %p282 = pneg %p60
        %s283 = sand.u32 %s78, 1
        %s284 = scalar_lea.sflag [#allocation4], %s283
        %s285 = sand.u32 %s78, 1
        %s286 = smul.addr %s285, 2048
        %s287 = scalar_lea.vmem [#allocation3], %s286
        %p288 = pneg %p91
        %p289 = pneg %p88
        %p290 = pneg %p112
        %p291 = pneg %p109
        %p292 = pneg %p133
        %p293 = pneg %p130
        %p294 = pneg %p161
        %p295 = pneg %p158
        %p296 = scmp.lt.s32.totalorder %s24, 1
        %s297 = scalar_select %p296, %s24, 1
        %p298 = scmp.lt.s32.totalorder %s25, 0
        %s299 = scalar_select %p298, %s25, 0
        %s300 = sadd.s32 %s299, %s297
        %s301 = smul.addr %s300, 2
        %s302 = scalar_lea.vmem %s4, %s301
        %s303 = sadd.s32 %s24, %s26
        %s304 = smul.u32 32, %s303
        %p305 = scmp.lt.s32.totalorder %s25, 0
        %s306 = scalar_select %p305, %s25, 0
        %p307 = scmp.lt.s32.totalorder %s304, 63
        %s308 = scalar_select %p307, %s304, 63
        %s309 = smul.addr %s306, 64
        %s310 = sadd.s32 %s308, %s309
        %s311 = smul.addr %s310, 2
        %s312 = scalar_lea.vmem %s0, %s311
        %s313 = sadd.s32 %s24, %s26
        %s314 = smul.u32 32, %s313
        %s315 = sadd.s32 %s24, %s26
        %s316 = smul.u32 512, %s315
        %p317 = scmp.lt.s32.totalorder %s24, 1
        %s318 = scalar_select %p317, %s24, 1
        %p319 = scmp.lt.s32.totalorder %s25, 0
        %s320 = scalar_select %p319, %s25, 0
        %s321 = sadd.s32 %s320, %s318
        %s322 = smul.addr %s321, 2
        %s323 = scalar_lea.vmem %s4, %s322
        %p324 = scmp.eq.s32.totalorder %s26, 0
        // Predicated region
        $region49: #{video_classifier_forward.1} parent=35 // pred_check
          %p325 = pneg %p324
        $region50: #{video_classifier_forward.1} parent=35 // pred_check_branch
          %327 = sbr.rel (%p325) target = $region52
        $region51: #{video_classifier_forward.1} parent=35 // pred_region
          %328 = vst [vmem:[#allocation2] sm:$0x3] 0.0
        $region52: #{video_classifier_forward.1} parent=35 // pred_fallthru
          _
        %v329 = vld [vmem:[#allocation2] sm:$0x3]
        %v330 = vld [vmem:[%s312] sm:$0xff]
        %v331 = vld [vmem:[%s312 + $0x8] sm:$0xff]
        %v332 = vld [vmem:[%s312 + $0x10] sm:$0xff]
        %v333 = vld [vmem:[%s312 + $0x18] sm:$0xff]
        %v334 = vld [vmem:[%s312 + $0x20] sm:$0xff]
        %v335 = vld [vmem:[%s312 + $0x28] sm:$0xff]
        %v336 = vld [vmem:[%s312 + $0x30] sm:$0xff]
        %v337 = vld [vmem:[%s312 + $0x38] sm:$0xff]
        %346 = vst [vmem:[#allocation1] ss:$4 sm:$0xff] %v330
        %s347 = scalar_lea.vmem [#allocation1], 32
        %348 = vst [vmem:[%s347] ss:$4 sm:$0xff] %v331
        %v349 = vld.sshfl [vmem:[#allocation1] sm:$0xff pattern:$0x73625140]
        %v350 = vld.sshfl [vmem:[#allocation1 + $0x8] sm:$0xff pattern:$0x73625140]
        %v351 = vld.sshfl [vmem:[#allocation1 + $0x10] sm:$0xff pattern:$0x73625140]
        %v352 = vld.sshfl [vmem:[#allocation1 + $0x18] sm:$0xff pattern:$0x73625140]
        %v353 = vld.sshfl [vmem:[#allocation1 + $0x20] sm:$0xff pattern:$0x73625140]
        %v354 = vld.sshfl [vmem:[#allocation1 + $0x28] sm:$0xff pattern:$0x73625140]
        %v355 = vld.sshfl [vmem:[#allocation1 + $0x30] sm:$0xff pattern:$0x73625140]
        %v356 = vld.sshfl [vmem:[#allocation1 + $0x38] sm:$0xff pattern:$0x73625140]
        %357 = vst [vmem:[#allocation1] ss:$4 sm:$0xff] %v332
        %358 = vst [vmem:[%s347] ss:$4 sm:$0xff] %v333
        %v359 = vld.sshfl [vmem:[#allocation1] sm:$0xff pattern:$0x73625140]
        %v360 = vld.sshfl [vmem:[#allocation1 + $0x8] sm:$0xff pattern:$0x73625140]
        %v361 = vld.sshfl [vmem:[#allocation1 + $0x10] sm:$0xff pattern:$0x73625140]
        %v362 = vld.sshfl [vmem:[#allocation1 + $0x18] sm:$0xff pattern:$0x73625140]
        %v363 = vld.sshfl [vmem:[#allocation1 + $0x20] sm:$0xff pattern:$0x73625140]
        %v364 = vld.sshfl [vmem:[#allocation1 + $0x28] sm:$0xff pattern:$0x73625140]
        %v365 = vld.sshfl [vmem:[#allocation1 + $0x30] sm:$0xff pattern:$0x73625140]
        %v366 = vld.sshfl [vmem:[#allocation1 + $0x38] sm:$0xff pattern:$0x73625140]
        %367 = vst [vmem:[#allocation1] ss:$4 sm:$0xff] %v334
        %368 = vst [vmem:[%s347] ss:$4 sm:$0xff] %v335
        %v369 = vld.sshfl [vmem:[#allocation1] sm:$0xff pattern:$0x73625140]
        %v370 = vld.sshfl [vmem:[#allocation1 + $0x8] sm:$0xff pattern:$0x73625140]
        %v371 = vld.sshfl [vmem:[#allocation1 + $0x10] sm:$0xff pattern:$0x73625140]
        %v372 = vld.sshfl [vmem:[#allocation1 + $0x18] sm:$0xff pattern:$0x73625140]
        %v373 = vld.sshfl [vmem:[#allocation1 + $0x20] sm:$0xff pattern:$0x73625140]
        %v374 = vld.sshfl [vmem:[#allocation1 + $0x28] sm:$0xff pattern:$0x73625140]
        %v375 = vld.sshfl [vmem:[#allocation1 + $0x30] sm:$0xff pattern:$0x73625140]
        %v376 = vld.sshfl [vmem:[#allocation1 + $0x38] sm:$0xff pattern:$0x73625140]
        %377 = vst [vmem:[#allocation1] ss:$4 sm:$0xff] %v336
        %378 = vst [vmem:[%s347] ss:$4 sm:$0xff] %v337
        %v379 = vld.sshfl [vmem:[#allocation1] sm:$0xff pattern:$0x73625140]
        %v380 = vld.sshfl [vmem:[#allocation1 + $0x8] sm:$0xff pattern:$0x73625140]
        %v381 = vld.sshfl [vmem:[#allocation1 + $0x10] sm:$0xff pattern:$0x73625140]
        %v382 = vld.sshfl [vmem:[#allocation1 + $0x18] sm:$0xff pattern:$0x73625140]
        %v383 = vld.sshfl [vmem:[#allocation1 + $0x20] sm:$0xff pattern:$0x73625140]
        %v384 = vld.sshfl [vmem:[#allocation1 + $0x28] sm:$0xff pattern:$0x73625140]
        %v385 = vld.sshfl [vmem:[#allocation1 + $0x30] sm:$0xff pattern:$0x73625140]
        %v386 = vld.sshfl [vmem:[#allocation1 + $0x38] sm:$0xff pattern:$0x73625140]
        %v419 = vpack.c.bf16 %v349, %v349
        %v420 = vpack.c.bf16 %v350, %v350
        %v421 = vpack.c.bf16 %v351, %v351
        %v422 = vpack.c.bf16 %v352, %v352
        %v423 = vpack.c.bf16 %v353, %v353
        %v424 = vpack.c.bf16 %v354, %v354
        %v425 = vpack.c.bf16 %v355, %v355
        %v426 = vpack.c.bf16 %v356, %v356
        %v427 = vpack.c.bf16 %v359, %v359
        %v428 = vpack.c.bf16 %v360, %v360
        %v429 = vpack.c.bf16 %v361, %v361
        %v430 = vpack.c.bf16 %v362, %v362
        %v431 = vpack.c.bf16 %v363, %v363
        %v432 = vpack.c.bf16 %v364, %v364
        %v433 = vpack.c.bf16 %v365, %v365
        %v434 = vpack.c.bf16 %v366, %v366
        %v435 = vpack.c.bf16 %v369, %v369
        %v436 = vpack.c.bf16 %v370, %v370
        %v437 = vpack.c.bf16 %v371, %v371
        %v438 = vpack.c.bf16 %v372, %v372
        %v439 = vpack.c.bf16 %v373, %v373
        %v440 = vpack.c.bf16 %v374, %v374
        %v441 = vpack.c.bf16 %v375, %v375
        %v442 = vpack.c.bf16 %v376, %v376
        %v443 = vpack.c.bf16 %v379, %v379
        %v444 = vpack.c.bf16 %v380, %v380
        %v445 = vpack.c.bf16 %v381, %v381
        %v446 = vpack.c.bf16 %v382, %v382
        %v447 = vpack.c.bf16 %v383, %v383
        %v448 = vpack.c.bf16 %v384, %v384
        %v449 = vpack.c.bf16 %v385, %v385
        %v450 = vpack.c.bf16 %v386, %v386
        %v451 = vld [vmem:[%s255] sm:$0xf]
        %v452 = vld [vmem:[%s255 + $0x4] sm:$0xf]
        %v453 = vld [vmem:[%s255 + $0x8] sm:$0xf]
        %v454 = vld [vmem:[%s255 + $0xc] sm:$0xf]
        %v455 = vld [vmem:[%s255 + $0x10] sm:$0xf]
        %v456 = vld [vmem:[%s255 + $0x14] sm:$0xf]
        %v457 = vld [vmem:[%s255 + $0x18] sm:$0xf]
        %v458 = vld [vmem:[%s255 + $0x1c] sm:$0xf]
        %v459 = vld [vmem:[%s255 + $0x20] sm:$0xf]
        %v460 = vld [vmem:[%s255 + $0x24] sm:$0xf]
        %v461 = vld [vmem:[%s255 + $0x28] sm:$0xf]
        %v462 = vld [vmem:[%s255 + $0x2c] sm:$0xf]
        %v463 = vld [vmem:[%s255 + $0x30] sm:$0xf]
        %v464 = vld [vmem:[%s255 + $0x34] sm:$0xf]
        %v465 = vld [vmem:[%s255 + $0x38] sm:$0xf]
        %v466 = vld [vmem:[%s255 + $0x3c] sm:$0xf]
        %v467 = vld [vmem:[%s255 + $0x40] sm:$0xf]
        %v468 = vld [vmem:[%s255 + $0x44] sm:$0xf]
        %v469 = vld [vmem:[%s255 + $0x48] sm:$0xf]
        %v470 = vld [vmem:[%s255 + $0x4c] sm:$0xf]
        %v471 = vld [vmem:[%s255 + $0x50] sm:$0xf]
        %v472 = vld [vmem:[%s255 + $0x54] sm:$0xf]
        %v473 = vld [vmem:[%s255 + $0x58] sm:$0xf]
        %v474 = vld [vmem:[%s255 + $0x5c] sm:$0xf]
        %v475 = vld [vmem:[%s255 + $0x60] sm:$0xf]
        %v476 = vld [vmem:[%s255 + $0x64] sm:$0xf]
        %v477 = vld [vmem:[%s255 + $0x68] sm:$0xf]
        %v478 = vld [vmem:[%s255 + $0x6c] sm:$0xf]
        %v479 = vld [vmem:[%s255 + $0x70] sm:$0xf]
        %v480 = vld [vmem:[%s255 + $0x74] sm:$0xf]
        %v481 = vld [vmem:[%s255 + $0x78] sm:$0xf]
        %v482 = vld [vmem:[%s255 + $0x7c] sm:$0xf]
        %v483 = vld [vmem:[%s255 + $0x80] sm:$0xf]
        %v484 = vld [vmem:[%s255 + $0x84] sm:$0xf]
        %v485 = vld [vmem:[%s255 + $0x88] sm:$0xf]
        %v486 = vld [vmem:[%s255 + $0x8c] sm:$0xf]
        %v487 = vld [vmem:[%s255 + $0x90] sm:$0xf]
        %v488 = vld [vmem:[%s255 + $0x94] sm:$0xf]
        %v489 = vld [vmem:[%s255 + $0x98] sm:$0xf]
        %v490 = vld [vmem:[%s255 + $0x9c] sm:$0xf]
        %v491 = vld [vmem:[%s255 + $0xa0] sm:$0xf]
        %v492 = vld [vmem:[%s255 + $0xa4] sm:$0xf]
        %v493 = vld [vmem:[%s255 + $0xa8] sm:$0xf]
        %v494 = vld [vmem:[%s255 + $0xac] sm:$0xf]
        %v495 = vld [vmem:[%s255 + $0xb0] sm:$0xf]
        %v496 = vld [vmem:[%s255 + $0xb4] sm:$0xf]
        %v497 = vld [vmem:[%s255 + $0xb8] sm:$0xf]
        %v498 = vld [vmem:[%s255 + $0xbc] sm:$0xf]
        %v499 = vld [vmem:[%s255 + $0xc0] sm:$0xf]
        %v500 = vld [vmem:[%s255 + $0xc4] sm:$0xf]
        %v501 = vld [vmem:[%s255 + $0xc8] sm:$0xf]
        %v502 = vld [vmem:[%s255 + $0xcc] sm:$0xf]
        %v503 = vld [vmem:[%s255 + $0xd0] sm:$0xf]
        %v504 = vld [vmem:[%s255 + $0xd4] sm:$0xf]
        %v505 = vld [vmem:[%s255 + $0xd8] sm:$0xf]
        %v506 = vld [vmem:[%s255 + $0xdc] sm:$0xf]
        %v507 = vld [vmem:[%s255 + $0xe0] sm:$0xf]
        %v508 = vld [vmem:[%s255 + $0xe4] sm:$0xf]
        %v509 = vld [vmem:[%s255 + $0xe8] sm:$0xf]
        %v510 = vld [vmem:[%s255 + $0xec] sm:$0xf]
        %v511 = vld [vmem:[%s255 + $0xf0] sm:$0xf]
        %v512 = vld [vmem:[%s255 + $0xf4] sm:$0xf]
        %v513 = vld [vmem:[%s255 + $0xf8] sm:$0xf]
        %v514 = vld [vmem:[%s255 + $0xfc] sm:$0xf]
        %v515 = vld [vmem:[%s255 + $0x100] sm:$0xf]
        %v516 = vld [vmem:[%s255 + $0x104] sm:$0xf]
        %v517 = vld [vmem:[%s255 + $0x108] sm:$0xf]
        %v518 = vld [vmem:[%s255 + $0x10c] sm:$0xf]
        %v519 = vld [vmem:[%s255 + $0x110] sm:$0xf]
        %v520 = vld [vmem:[%s255 + $0x114] sm:$0xf]
        %v521 = vld [vmem:[%s255 + $0x118] sm:$0xf]
        %v522 = vld [vmem:[%s255 + $0x11c] sm:$0xf]
        %v523 = vld [vmem:[%s255 + $0x120] sm:$0xf]
        %v524 = vld [vmem:[%s255 + $0x124] sm:$0xf]
        %v525 = vld [vmem:[%s255 + $0x128] sm:$0xf]
        %v526 = vld [vmem:[%s255 + $0x12c] sm:$0xf]
        %v527 = vld [vmem:[%s255 + $0x130] sm:$0xf]
        %v528 = vld [vmem:[%s255 + $0x134] sm:$0xf]
        %v529 = vld [vmem:[%s255 + $0x138] sm:$0xf]
        %v530 = vld [vmem:[%s255 + $0x13c] sm:$0xf]
        %v531 = vld [vmem:[%s255 + $0x140] sm:$0xf]
        %v532 = vld [vmem:[%s255 + $0x144] sm:$0xf]
        %v533 = vld [vmem:[%s255 + $0x148] sm:$0xf]
        %v534 = vld [vmem:[%s255 + $0x14c] sm:$0xf]
        %v535 = vld [vmem:[%s255 + $0x150] sm:$0xf]
        %v536 = vld [vmem:[%s255 + $0x154] sm:$0xf]
        %v537 = vld [vmem:[%s255 + $0x158] sm:$0xf]
        %v538 = vld [vmem:[%s255 + $0x15c] sm:$0xf]
        %v539 = vld [vmem:[%s255 + $0x160] sm:$0xf]
        %v540 = vld [vmem:[%s255 + $0x164] sm:$0xf]
        %v541 = vld [vmem:[%s255 + $0x168] sm:$0xf]
        %v542 = vld [vmem:[%s255 + $0x16c] sm:$0xf]
        %v543 = vld [vmem:[%s255 + $0x170] sm:$0xf]
        %v544 = vld [vmem:[%s255 + $0x174] sm:$0xf]
        %v545 = vld [vmem:[%s255 + $0x178] sm:$0xf]
        %v546 = vld [vmem:[%s255 + $0x17c] sm:$0xf]
        %v547 = vld [vmem:[%s255 + $0x180] sm:$0xf]
        %v548 = vld [vmem:[%s255 + $0x184] sm:$0xf]
        %v549 = vld [vmem:[%s255 + $0x188] sm:$0xf]
        %v550 = vld [vmem:[%s255 + $0x18c] sm:$0xf]
        %v551 = vld [vmem:[%s255 + $0x190] sm:$0xf]
        %v552 = vld [vmem:[%s255 + $0x194] sm:$0xf]
        %v553 = vld [vmem:[%s255 + $0x198] sm:$0xf]
        %v554 = vld [vmem:[%s255 + $0x19c] sm:$0xf]
        %v555 = vld [vmem:[%s255 + $0x1a0] sm:$0xf]
        %v556 = vld [vmem:[%s255 + $0x1a4] sm:$0xf]
        %v557 = vld [vmem:[%s255 + $0x1a8] sm:$0xf]
        %v558 = vld [vmem:[%s255 + $0x1ac] sm:$0xf]
        %v559 = vld [vmem:[%s255 + $0x1b0] sm:$0xf]
        %v560 = vld [vmem:[%s255 + $0x1b4] sm:$0xf]
        %v561 = vld [vmem:[%s255 + $0x1b8] sm:$0xf]
        %v562 = vld [vmem:[%s255 + $0x1bc] sm:$0xf]
        %v563 = vld [vmem:[%s255 + $0x1c0] sm:$0xf]
        %v564 = vld [vmem:[%s255 + $0x1c4] sm:$0xf]
        %v565 = vld [vmem:[%s255 + $0x1c8] sm:$0xf]
        %v566 = vld [vmem:[%s255 + $0x1cc] sm:$0xf]
        %v567 = vld [vmem:[%s255 + $0x1d0] sm:$0xf]
        %v568 = vld [vmem:[%s255 + $0x1d4] sm:$0xf]
        %v569 = vld [vmem:[%s255 + $0x1d8] sm:$0xf]
        %v570 = vld [vmem:[%s255 + $0x1dc] sm:$0xf]
        %v571 = vld [vmem:[%s255 + $0x1e0] sm:$0xf]
        %v572 = vld [vmem:[%s255 + $0x1e4] sm:$0xf]
        %v573 = vld [vmem:[%s255 + $0x1e8] sm:$0xf]
        %v574 = vld [vmem:[%s255 + $0x1ec] sm:$0xf]
        %v575 = vld [vmem:[%s255 + $0x1f0] sm:$0xf]
        %v576 = vld [vmem:[%s255 + $0x1f4] sm:$0xf]
        %v577 = vld [vmem:[%s255 + $0x1f8] sm:$0xf]
        %v578 = vld [vmem:[%s255 + $0x1fc] sm:$0xf]
        %v579 = vld [vmem:[%s255 + $0x200] sm:$0xf]
        %v580 = vld [vmem:[%s255 + $0x204] sm:$0xf]
        %v581 = vld [vmem:[%s255 + $0x208] sm:$0xf]
        %v582 = vld [vmem:[%s255 + $0x20c] sm:$0xf]
        %v583 = vld [vmem:[%s255 + $0x210] sm:$0xf]
        %v584 = vld [vmem:[%s255 + $0x214] sm:$0xf]
        %v585 = vld [vmem:[%s255 + $0x218] sm:$0xf]
        %v586 = vld [vmem:[%s255 + $0x21c] sm:$0xf]
        %v587 = vld [vmem:[%s255 + $0x220] sm:$0xf]
        %v588 = vld [vmem:[%s255 + $0x224] sm:$0xf]
        %v589 = vld [vmem:[%s255 + $0x228] sm:$0xf]
        %v590 = vld [vmem:[%s255 + $0x22c] sm:$0xf]
        %v591 = vld [vmem:[%s255 + $0x230] sm:$0xf]
        %v592 = vld [vmem:[%s255 + $0x234] sm:$0xf]
        %v593 = vld [vmem:[%s255 + $0x238] sm:$0xf]
        %v594 = vld [vmem:[%s255 + $0x23c] sm:$0xf]
        %v595 = vld [vmem:[%s255 + $0x240] sm:$0xf]
        %v596 = vld [vmem:[%s255 + $0x244] sm:$0xf]
        %v597 = vld [vmem:[%s255 + $0x248] sm:$0xf]
        %v598 = vld [vmem:[%s255 + $0x24c] sm:$0xf]
        %v599 = vld [vmem:[%s255 + $0x250] sm:$0xf]
        %v600 = vld [vmem:[%s255 + $0x254] sm:$0xf]
        %v601 = vld [vmem:[%s255 + $0x258] sm:$0xf]
        %v602 = vld [vmem:[%s255 + $0x25c] sm:$0xf]
        %v603 = vld [vmem:[%s255 + $0x260] sm:$0xf]
        %v604 = vld [vmem:[%s255 + $0x264] sm:$0xf]
        %v605 = vld [vmem:[%s255 + $0x268] sm:$0xf]
        %v606 = vld [vmem:[%s255 + $0x26c] sm:$0xf]
        %v607 = vld [vmem:[%s255 + $0x270] sm:$0xf]
        %v608 = vld [vmem:[%s255 + $0x274] sm:$0xf]
        %v609 = vld [vmem:[%s255 + $0x278] sm:$0xf]
        %v610 = vld [vmem:[%s255 + $0x27c] sm:$0xf]
        %v611 = vld [vmem:[%s255 + $0x280] sm:$0xf]
        %v612 = vld [vmem:[%s255 + $0x284] sm:$0xf]
        %v613 = vld [vmem:[%s255 + $0x288] sm:$0xf]
        %v614 = vld [vmem:[%s255 + $0x28c] sm:$0xf]
        %v615 = vld [vmem:[%s255 + $0x290] sm:$0xf]
        %v616 = vld [vmem:[%s255 + $0x294] sm:$0xf]
        %v617 = vld [vmem:[%s255 + $0x298] sm:$0xf]
        %v618 = vld [vmem:[%s255 + $0x29c] sm:$0xf]
        %v619 = vld [vmem:[%s255 + $0x2a0] sm:$0xf]
        %v620 = vld [vmem:[%s255 + $0x2a4] sm:$0xf]
        %v621 = vld [vmem:[%s255 + $0x2a8] sm:$0xf]
        %v622 = vld [vmem:[%s255 + $0x2ac] sm:$0xf]
        %v623 = vld [vmem:[%s255 + $0x2b0] sm:$0xf]
        %v624 = vld [vmem:[%s255 + $0x2b4] sm:$0xf]
        %v625 = vld [vmem:[%s255 + $0x2b8] sm:$0xf]
        %v626 = vld [vmem:[%s255 + $0x2bc] sm:$0xf]
        %v627 = vld [vmem:[%s255 + $0x2c0] sm:$0xf]
        %v628 = vld [vmem:[%s255 + $0x2c4] sm:$0xf]
        %v629 = vld [vmem:[%s255 + $0x2c8] sm:$0xf]
        %v630 = vld [vmem:[%s255 + $0x2cc] sm:$0xf]
        %v631 = vld [vmem:[%s255 + $0x2d0] sm:$0xf]
        %v632 = vld [vmem:[%s255 + $0x2d4] sm:$0xf]
        %v633 = vld [vmem:[%s255 + $0x2d8] sm:$0xf]
        %v634 = vld [vmem:[%s255 + $0x2dc] sm:$0xf]
        %v635 = vld [vmem:[%s255 + $0x2e0] sm:$0xf]
        %v636 = vld [vmem:[%s255 + $0x2e4] sm:$0xf]
        %v637 = vld [vmem:[%s255 + $0x2e8] sm:$0xf]
        %v638 = vld [vmem:[%s255 + $0x2ec] sm:$0xf]
        %v639 = vld [vmem:[%s255 + $0x2f0] sm:$0xf]
        %v640 = vld [vmem:[%s255 + $0x2f4] sm:$0xf]
        %v641 = vld [vmem:[%s255 + $0x2f8] sm:$0xf]
        %v642 = vld [vmem:[%s255 + $0x2fc] sm:$0xf]
        %v643 = vld [vmem:[%s255 + $0x300] sm:$0xf]
        %v644 = vld [vmem:[%s255 + $0x304] sm:$0xf]
        %v645 = vld [vmem:[%s255 + $0x308] sm:$0xf]
        %v646 = vld [vmem:[%s255 + $0x30c] sm:$0xf]
        %v647 = vld [vmem:[%s255 + $0x310] sm:$0xf]
        %v648 = vld [vmem:[%s255 + $0x314] sm:$0xf]
        %v649 = vld [vmem:[%s255 + $0x318] sm:$0xf]
        %v650 = vld [vmem:[%s255 + $0x31c] sm:$0xf]
        %v651 = vld [vmem:[%s255 + $0x320] sm:$0xf]
        %v652 = vld [vmem:[%s255 + $0x324] sm:$0xf]
        %v653 = vld [vmem:[%s255 + $0x328] sm:$0xf]
        %v654 = vld [vmem:[%s255 + $0x32c] sm:$0xf]
        %v655 = vld [vmem:[%s255 + $0x330] sm:$0xf]
        %v656 = vld [vmem:[%s255 + $0x334] sm:$0xf]
        %v657 = vld [vmem:[%s255 + $0x338] sm:$0xf]
        %v658 = vld [vmem:[%s255 + $0x33c] sm:$0xf]
        %v659 = vld [vmem:[%s255 + $0x340] sm:$0xf]
        %v660 = vld [vmem:[%s255 + $0x344] sm:$0xf]
        %v661 = vld [vmem:[%s255 + $0x348] sm:$0xf]
        %v662 = vld [vmem:[%s255 + $0x34c] sm:$0xf]
        %v663 = vld [vmem:[%s255 + $0x350] sm:$0xf]
        %v664 = vld [vmem:[%s255 + $0x354] sm:$0xf]
        %v665 = vld [vmem:[%s255 + $0x358] sm:$0xf]
        %v666 = vld [vmem:[%s255 + $0x35c] sm:$0xf]
        %v667 = vld [vmem:[%s255 + $0x360] sm:$0xf]
        %v668 = vld [vmem:[%s255 + $0x364] sm:$0xf]
        %v669 = vld [vmem:[%s255 + $0x368] sm:$0xf]
        %v670 = vld [vmem:[%s255 + $0x36c] sm:$0xf]
        %v671 = vld [vmem:[%s255 + $0x370] sm:$0xf]
        %v672 = vld [vmem:[%s255 + $0x374] sm:$0xf]
        %v673 = vld [vmem:[%s255 + $0x378] sm:$0xf]
        %v674 = vld [vmem:[%s255 + $0x37c] sm:$0xf]
        %v675 = vld [vmem:[%s255 + $0x380] sm:$0xf]
        %v676 = vld [vmem:[%s255 + $0x384] sm:$0xf]
        %v677 = vld [vmem:[%s255 + $0x388] sm:$0xf]
        %v678 = vld [vmem:[%s255 + $0x38c] sm:$0xf]
        %v679 = vld [vmem:[%s255 + $0x390] sm:$0xf]
        %v680 = vld [vmem:[%s255 + $0x394] sm:$0xf]
        %v681 = vld [vmem:[%s255 + $0x398] sm:$0xf]
        %v682 = vld [vmem:[%s255 + $0x39c] sm:$0xf]
        %v683 = vld [vmem:[%s255 + $0x3a0] sm:$0xf]
        %v684 = vld [vmem:[%s255 + $0x3a4] sm:$0xf]
        %v685 = vld [vmem:[%s255 + $0x3a8] sm:$0xf]
        %v686 = vld [vmem:[%s255 + $0x3ac] sm:$0xf]
        %v687 = vld [vmem:[%s255 + $0x3b0] sm:$0xf]
        %v688 = vld [vmem:[%s255 + $0x3b4] sm:$0xf]
        %v689 = vld [vmem:[%s255 + $0x3b8] sm:$0xf]
        %v690 = vld [vmem:[%s255 + $0x3bc] sm:$0xf]
        %v691 = vld [vmem:[%s255 + $0x3c0] sm:$0xf]
        %v692 = vld [vmem:[%s255 + $0x3c4] sm:$0xf]
        %v693 = vld [vmem:[%s255 + $0x3c8] sm:$0xf]
        %v694 = vld [vmem:[%s255 + $0x3cc] sm:$0xf]
        %v695 = vld [vmem:[%s255 + $0x3d0] sm:$0xf]
        %v696 = vld [vmem:[%s255 + $0x3d4] sm:$0xf]
        %v697 = vld [vmem:[%s255 + $0x3d8] sm:$0xf]
        %v698 = vld [vmem:[%s255 + $0x3dc] sm:$0xf]
        %v699 = vld [vmem:[%s255 + $0x3e0] sm:$0xf]
        %v700 = vld [vmem:[%s255 + $0x3e4] sm:$0xf]
        %v701 = vld [vmem:[%s255 + $0x3e8] sm:$0xf]
        %v702 = vld [vmem:[%s255 + $0x3ec] sm:$0xf]
        %v703 = vld [vmem:[%s255 + $0x3f0] sm:$0xf]
        %v704 = vld [vmem:[%s255 + $0x3f4] sm:$0xf]
        %v705 = vld [vmem:[%s255 + $0x3f8] sm:$0xf]
        %v706 = vld [vmem:[%s255 + $0x3fc] sm:$0xf]
        %v707 = vld [vmem:[%s255 + $0x400] sm:$0xf]
        %v708 = vld [vmem:[%s255 + $0x404] sm:$0xf]
        %v709 = vld [vmem:[%s255 + $0x408] sm:$0xf]
        %v710 = vld [vmem:[%s255 + $0x40c] sm:$0xf]
        %v711 = vld [vmem:[%s255 + $0x410] sm:$0xf]
        %v712 = vld [vmem:[%s255 + $0x414] sm:$0xf]
        %v713 = vld [vmem:[%s255 + $0x418] sm:$0xf]
        %v714 = vld [vmem:[%s255 + $0x41c] sm:$0xf]
        %v715 = vld [vmem:[%s255 + $0x420] sm:$0xf]
        %v716 = vld [vmem:[%s255 + $0x424] sm:$0xf]
        %v717 = vld [vmem:[%s255 + $0x428] sm:$0xf]
        %v718 = vld [vmem:[%s255 + $0x42c] sm:$0xf]
        %v719 = vld [vmem:[%s255 + $0x430] sm:$0xf]
        %v720 = vld [vmem:[%s255 + $0x434] sm:$0xf]
        %v721 = vld [vmem:[%s255 + $0x438] sm:$0xf]
        %v722 = vld [vmem:[%s255 + $0x43c] sm:$0xf]
        %v723 = vld [vmem:[%s255 + $0x440] sm:$0xf]
        %v724 = vld [vmem:[%s255 + $0x444] sm:$0xf]
        %v725 = vld [vmem:[%s255 + $0x448] sm:$0xf]
        %v726 = vld [vmem:[%s255 + $0x44c] sm:$0xf]
        %v727 = vld [vmem:[%s255 + $0x450] sm:$0xf]
        %v728 = vld [vmem:[%s255 + $0x454] sm:$0xf]
        %v729 = vld [vmem:[%s255 + $0x458] sm:$0xf]
        %v730 = vld [vmem:[%s255 + $0x45c] sm:$0xf]
        %v731 = vld [vmem:[%s255 + $0x460] sm:$0xf]
        %v732 = vld [vmem:[%s255 + $0x464] sm:$0xf]
        %v733 = vld [vmem:[%s255 + $0x468] sm:$0xf]
        %v734 = vld [vmem:[%s255 + $0x46c] sm:$0xf]
        %v735 = vld [vmem:[%s255 + $0x470] sm:$0xf]
        %v736 = vld [vmem:[%s255 + $0x474] sm:$0xf]
        %v737 = vld [vmem:[%s255 + $0x478] sm:$0xf]
        %v738 = vld [vmem:[%s255 + $0x47c] sm:$0xf]
        %v739 = vld [vmem:[%s255 + $0x480] sm:$0xf]
        %v740 = vld [vmem:[%s255 + $0x484] sm:$0xf]
        %v741 = vld [vmem:[%s255 + $0x488] sm:$0xf]
        %v742 = vld [vmem:[%s255 + $0x48c] sm:$0xf]
        %v743 = vld [vmem:[%s255 + $0x490] sm:$0xf]
        %v744 = vld [vmem:[%s255 + $0x494] sm:$0xf]
        %v745 = vld [vmem:[%s255 + $0x498] sm:$0xf]
        %v746 = vld [vmem:[%s255 + $0x49c] sm:$0xf]
        %v747 = vld [vmem:[%s255 + $0x4a0] sm:$0xf]
        %v748 = vld [vmem:[%s255 + $0x4a4] sm:$0xf]
        %v749 = vld [vmem:[%s255 + $0x4a8] sm:$0xf]
        %v750 = vld [vmem:[%s255 + $0x4ac] sm:$0xf]
        %v751 = vld [vmem:[%s255 + $0x4b0] sm:$0xf]
        %v752 = vld [vmem:[%s255 + $0x4b4] sm:$0xf]
        %v753 = vld [vmem:[%s255 + $0x4b8] sm:$0xf]
        %v754 = vld [vmem:[%s255 + $0x4bc] sm:$0xf]
        %v755 = vld [vmem:[%s255 + $0x4c0] sm:$0xf]
        %v756 = vld [vmem:[%s255 + $0x4c4] sm:$0xf]
        %v757 = vld [vmem:[%s255 + $0x4c8] sm:$0xf]
        %v758 = vld [vmem:[%s255 + $0x4cc] sm:$0xf]
        %v759 = vld [vmem:[%s255 + $0x4d0] sm:$0xf]
        %v760 = vld [vmem:[%s255 + $0x4d4] sm:$0xf]
        %v761 = vld [vmem:[%s255 + $0x4d8] sm:$0xf]
        %v762 = vld [vmem:[%s255 + $0x4dc] sm:$0xf]
        %v763 = vld [vmem:[%s255 + $0x4e0] sm:$0xf]
        %v764 = vld [vmem:[%s255 + $0x4e4] sm:$0xf]
        %v765 = vld [vmem:[%s255 + $0x4e8] sm:$0xf]
        %v766 = vld [vmem:[%s255 + $0x4ec] sm:$0xf]
        %v767 = vld [vmem:[%s255 + $0x4f0] sm:$0xf]
        %v768 = vld [vmem:[%s255 + $0x4f4] sm:$0xf]
        %v769 = vld [vmem:[%s255 + $0x4f8] sm:$0xf]
        %v770 = vld [vmem:[%s255 + $0x4fc] sm:$0xf]
        %v771 = vld [vmem:[%s255 + $0x500] sm:$0xf]
        %v772 = vld [vmem:[%s255 + $0x504] sm:$0xf]
        %v773 = vld [vmem:[%s255 + $0x508] sm:$0xf]
        %v774 = vld [vmem:[%s255 + $0x50c] sm:$0xf]
        %v775 = vld [vmem:[%s255 + $0x510] sm:$0xf]
        %v776 = vld [vmem:[%s255 + $0x514] sm:$0xf]
        %v777 = vld [vmem:[%s255 + $0x518] sm:$0xf]
        %v778 = vld [vmem:[%s255 + $0x51c] sm:$0xf]
        %v779 = vld [vmem:[%s255 + $0x520] sm:$0xf]
        %v780 = vld [vmem:[%s255 + $0x524] sm:$0xf]
        %v781 = vld [vmem:[%s255 + $0x528] sm:$0xf]
        %v782 = vld [vmem:[%s255 + $0x52c] sm:$0xf]
        %v783 = vld [vmem:[%s255 + $0x530] sm:$0xf]
        %v784 = vld [vmem:[%s255 + $0x534] sm:$0xf]
        %v785 = vld [vmem:[%s255 + $0x538] sm:$0xf]
        %v786 = vld [vmem:[%s255 + $0x53c] sm:$0xf]
        %v787 = vld [vmem:[%s255 + $0x540] sm:$0xf]
        %v788 = vld [vmem:[%s255 + $0x544] sm:$0xf]
        %v789 = vld [vmem:[%s255 + $0x548] sm:$0xf]
        %v790 = vld [vmem:[%s255 + $0x54c] sm:$0xf]
        %v791 = vld [vmem:[%s255 + $0x550] sm:$0xf]
        %v792 = vld [vmem:[%s255 + $0x554] sm:$0xf]
        %v793 = vld [vmem:[%s255 + $0x558] sm:$0xf]
        %v794 = vld [vmem:[%s255 + $0x55c] sm:$0xf]
        %v795 = vld [vmem:[%s255 + $0x560] sm:$0xf]
        %v796 = vld [vmem:[%s255 + $0x564] sm:$0xf]
        %v797 = vld [vmem:[%s255 + $0x568] sm:$0xf]
        %v798 = vld [vmem:[%s255 + $0x56c] sm:$0xf]
        %v799 = vld [vmem:[%s255 + $0x570] sm:$0xf]
        %v800 = vld [vmem:[%s255 + $0x574] sm:$0xf]
        %v801 = vld [vmem:[%s255 + $0x578] sm:$0xf]
        %v802 = vld [vmem:[%s255 + $0x57c] sm:$0xf]
        %v803 = vld [vmem:[%s255 + $0x580] sm:$0xf]
        %v804 = vld [vmem:[%s255 + $0x584] sm:$0xf]
        %v805 = vld [vmem:[%s255 + $0x588] sm:$0xf]
        %v806 = vld [vmem:[%s255 + $0x58c] sm:$0xf]
        %v807 = vld [vmem:[%s255 + $0x590] sm:$0xf]
        %v808 = vld [vmem:[%s255 + $0x594] sm:$0xf]
        %v809 = vld [vmem:[%s255 + $0x598] sm:$0xf]
        %v810 = vld [vmem:[%s255 + $0x59c] sm:$0xf]
        %v811 = vld [vmem:[%s255 + $0x5a0] sm:$0xf]
        %v812 = vld [vmem:[%s255 + $0x5a4] sm:$0xf]
        %v813 = vld [vmem:[%s255 + $0x5a8] sm:$0xf]
        %v814 = vld [vmem:[%s255 + $0x5ac] sm:$0xf]
        %v815 = vld [vmem:[%s255 + $0x5b0] sm:$0xf]
        %v816 = vld [vmem:[%s255 + $0x5b4] sm:$0xf]
        %v817 = vld [vmem:[%s255 + $0x5b8] sm:$0xf]
        %v818 = vld [vmem:[%s255 + $0x5bc] sm:$0xf]
        %v819 = vld [vmem:[%s255 + $0x5c0] sm:$0xf]
        %v820 = vld [vmem:[%s255 + $0x5c4] sm:$0xf]
        %v821 = vld [vmem:[%s255 + $0x5c8] sm:$0xf]
        %v822 = vld [vmem:[%s255 + $0x5cc] sm:$0xf]
        %v823 = vld [vmem:[%s255 + $0x5d0] sm:$0xf]
        %v824 = vld [vmem:[%s255 + $0x5d4] sm:$0xf]
        %v825 = vld [vmem:[%s255 + $0x5d8] sm:$0xf]
        %v826 = vld [vmem:[%s255 + $0x5dc] sm:$0xf]
        %v827 = vld [vmem:[%s255 + $0x5e0] sm:$0xf]
        %v828 = vld [vmem:[%s255 + $0x5e4] sm:$0xf]
        %v829 = vld [vmem:[%s255 + $0x5e8] sm:$0xf]
        %v830 = vld [vmem:[%s255 + $0x5ec] sm:$0xf]
        %v831 = vld [vmem:[%s255 + $0x5f0] sm:$0xf]
        %v832 = vld [vmem:[%s255 + $0x5f4] sm:$0xf]
        %v833 = vld [vmem:[%s255 + $0x5f8] sm:$0xf]
        %v834 = vld [vmem:[%s255 + $0x5fc] sm:$0xf]
        %v835 = vld [vmem:[%s255 + $0x600] sm:$0xf]
        %v836 = vld [vmem:[%s255 + $0x604] sm:$0xf]
        %v837 = vld [vmem:[%s255 + $0x608] sm:$0xf]
        %v838 = vld [vmem:[%s255 + $0x60c] sm:$0xf]
        %v839 = vld [vmem:[%s255 + $0x610] sm:$0xf]
        %v840 = vld [vmem:[%s255 + $0x614] sm:$0xf]
        %v841 = vld [vmem:[%s255 + $0x618] sm:$0xf]
        %v842 = vld [vmem:[%s255 + $0x61c] sm:$0xf]
        %v843 = vld [vmem:[%s255 + $0x620] sm:$0xf]
        %v844 = vld [vmem:[%s255 + $0x624] sm:$0xf]
        %v845 = vld [vmem:[%s255 + $0x628] sm:$0xf]
        %v846 = vld [vmem:[%s255 + $0x62c] sm:$0xf]
        %v847 = vld [vmem:[%s255 + $0x630] sm:$0xf]
        %v848 = vld [vmem:[%s255 + $0x634] sm:$0xf]
        %v849 = vld [vmem:[%s255 + $0x638] sm:$0xf]
        %v850 = vld [vmem:[%s255 + $0x63c] sm:$0xf]
        %v851 = vld [vmem:[%s255 + $0x640] sm:$0xf]
        %v852 = vld [vmem:[%s255 + $0x644] sm:$0xf]
        %v853 = vld [vmem:[%s255 + $0x648] sm:$0xf]
        %v854 = vld [vmem:[%s255 + $0x64c] sm:$0xf]
        %v855 = vld [vmem:[%s255 + $0x650] sm:$0xf]
        %v856 = vld [vmem:[%s255 + $0x654] sm:$0xf]
        %v857 = vld [vmem:[%s255 + $0x658] sm:$0xf]
        %v858 = vld [vmem:[%s255 + $0x65c] sm:$0xf]
        %v859 = vld [vmem:[%s255 + $0x660] sm:$0xf]
        %v860 = vld [vmem:[%s255 + $0x664] sm:$0xf]
        %v861 = vld [vmem:[%s255 + $0x668] sm:$0xf]
        %v862 = vld [vmem:[%s255 + $0x66c] sm:$0xf]
        %v863 = vld [vmem:[%s255 + $0x670] sm:$0xf]
        %v864 = vld [vmem:[%s255 + $0x674] sm:$0xf]
        %v865 = vld [vmem:[%s255 + $0x678] sm:$0xf]
        %v866 = vld [vmem:[%s255 + $0x67c] sm:$0xf]
        %v867 = vld [vmem:[%s255 + $0x680] sm:$0xf]
        %v868 = vld [vmem:[%s255 + $0x684] sm:$0xf]
        %v869 = vld [vmem:[%s255 + $0x688] sm:$0xf]
        %v870 = vld [vmem:[%s255 + $0x68c] sm:$0xf]
        %v871 = vld [vmem:[%s255 + $0x690] sm:$0xf]
        %v872 = vld [vmem:[%s255 + $0x694] sm:$0xf]
        %v873 = vld [vmem:[%s255 + $0x698] sm:$0xf]
        %v874 = vld [vmem:[%s255 + $0x69c] sm:$0xf]
        %v875 = vld [vmem:[%s255 + $0x6a0] sm:$0xf]
        %v876 = vld [vmem:[%s255 + $0x6a4] sm:$0xf]
        %v877 = vld [vmem:[%s255 + $0x6a8] sm:$0xf]
        %v878 = vld [vmem:[%s255 + $0x6ac] sm:$0xf]
        %v879 = vld [vmem:[%s255 + $0x6b0] sm:$0xf]
        %v880 = vld [vmem:[%s255 + $0x6b4] sm:$0xf]
        %v881 = vld [vmem:[%s255 + $0x6b8] sm:$0xf]
        %v882 = vld [vmem:[%s255 + $0x6bc] sm:$0xf]
        %v883 = vld [vmem:[%s255 + $0x6c0] sm:$0xf]
        %v884 = vld [vmem:[%s255 + $0x6c4] sm:$0xf]
        %v885 = vld [vmem:[%s255 + $0x6c8] sm:$0xf]
        %v886 = vld [vmem:[%s255 + $0x6cc] sm:$0xf]
        %v887 = vld [vmem:[%s255 + $0x6d0] sm:$0xf]
        %v888 = vld [vmem:[%s255 + $0x6d4] sm:$0xf]
        %v889 = vld [vmem:[%s255 + $0x6d8] sm:$0xf]
        %v890 = vld [vmem:[%s255 + $0x6dc] sm:$0xf]
        %v891 = vld [vmem:[%s255 + $0x6e0] sm:$0xf]
        %v892 = vld [vmem:[%s255 + $0x6e4] sm:$0xf]
        %v893 = vld [vmem:[%s255 + $0x6e8] sm:$0xf]
        %v894 = vld [vmem:[%s255 + $0x6ec] sm:$0xf]
        %v895 = vld [vmem:[%s255 + $0x6f0] sm:$0xf]
        %v896 = vld [vmem:[%s255 + $0x6f4] sm:$0xf]
        %v897 = vld [vmem:[%s255 + $0x6f8] sm:$0xf]
        %v898 = vld [vmem:[%s255 + $0x6fc] sm:$0xf]
        %v899 = vld [vmem:[%s255 + $0x700] sm:$0xf]
        %v900 = vld [vmem:[%s255 + $0x704] sm:$0xf]
        %v901 = vld [vmem:[%s255 + $0x708] sm:$0xf]
        %v902 = vld [vmem:[%s255 + $0x70c] sm:$0xf]
        %v903 = vld [vmem:[%s255 + $0x710] sm:$0xf]
        %v904 = vld [vmem:[%s255 + $0x714] sm:$0xf]
        %v905 = vld [vmem:[%s255 + $0x718] sm:$0xf]
        %v906 = vld [vmem:[%s255 + $0x71c] sm:$0xf]
        %v907 = vld [vmem:[%s255 + $0x720] sm:$0xf]
        %v908 = vld [vmem:[%s255 + $0x724] sm:$0xf]
        %v909 = vld [vmem:[%s255 + $0x728] sm:$0xf]
        %v910 = vld [vmem:[%s255 + $0x72c] sm:$0xf]
        %v911 = vld [vmem:[%s255 + $0x730] sm:$0xf]
        %v912 = vld [vmem:[%s255 + $0x734] sm:$0xf]
        %v913 = vld [vmem:[%s255 + $0x738] sm:$0xf]
        %v914 = vld [vmem:[%s255 + $0x73c] sm:$0xf]
        %v915 = vld [vmem:[%s255 + $0x740] sm:$0xf]
        %v916 = vld [vmem:[%s255 + $0x744] sm:$0xf]
        %v917 = vld [vmem:[%s255 + $0x748] sm:$0xf]
        %v918 = vld [vmem:[%s255 + $0x74c] sm:$0xf]
        %v919 = vld [vmem:[%s255 + $0x750] sm:$0xf]
        %v920 = vld [vmem:[%s255 + $0x754] sm:$0xf]
        %v921 = vld [vmem:[%s255 + $0x758] sm:$0xf]
        %v922 = vld [vmem:[%s255 + $0x75c] sm:$0xf]
        %v923 = vld [vmem:[%s255 + $0x760] sm:$0xf]
        %v924 = vld [vmem:[%s255 + $0x764] sm:$0xf]
        %v925 = vld [vmem:[%s255 + $0x768] sm:$0xf]
        %v926 = vld [vmem:[%s255 + $0x76c] sm:$0xf]
        %v927 = vld [vmem:[%s255 + $0x770] sm:$0xf]
        %v928 = vld [vmem:[%s255 + $0x774] sm:$0xf]
        %v929 = vld [vmem:[%s255 + $0x778] sm:$0xf]
        %v930 = vld [vmem:[%s255 + $0x77c] sm:$0xf]
        %v931 = vld [vmem:[%s255 + $0x780] sm:$0xf]
        %v932 = vld [vmem:[%s255 + $0x784] sm:$0xf]
        %v933 = vld [vmem:[%s255 + $0x788] sm:$0xf]
        %v934 = vld [vmem:[%s255 + $0x78c] sm:$0xf]
        %v935 = vld [vmem:[%s255 + $0x790] sm:$0xf]
        %v936 = vld [vmem:[%s255 + $0x794] sm:$0xf]
        %v937 = vld [vmem:[%s255 + $0x798] sm:$0xf]
        %v938 = vld [vmem:[%s255 + $0x79c] sm:$0xf]
        %v939 = vld [vmem:[%s255 + $0x7a0] sm:$0xf]
        %v940 = vld [vmem:[%s255 + $0x7a4] sm:$0xf]
        %v941 = vld [vmem:[%s255 + $0x7a8] sm:$0xf]
        %v942 = vld [vmem:[%s255 + $0x7ac] sm:$0xf]
        %v943 = vld [vmem:[%s255 + $0x7b0] sm:$0xf]
        %v944 = vld [vmem:[%s255 + $0x7b4] sm:$0xf]
        %v945 = vld [vmem:[%s255 + $0x7b8] sm:$0xf]
        %v946 = vld [vmem:[%s255 + $0x7bc] sm:$0xf]
        %v947 = vld [vmem:[%s255 + $0x7c0] sm:$0xf]
        %v948 = vld [vmem:[%s255 + $0x7c4] sm:$0xf]
        %v949 = vld [vmem:[%s255 + $0x7c8] sm:$0xf]
        %v950 = vld [vmem:[%s255 + $0x7cc] sm:$0xf]
        %v951 = vld [vmem:[%s255 + $0x7d0] sm:$0xf]
        %v952 = vld [vmem:[%s255 + $0x7d4] sm:$0xf]
        %v953 = vld [vmem:[%s255 + $0x7d8] sm:$0xf]
        %v954 = vld [vmem:[%s255 + $0x7dc] sm:$0xf]
        %v955 = vld [vmem:[%s255 + $0x7e0] sm:$0xf]
        %v956 = vld [vmem:[%s255 + $0x7e4] sm:$0xf]
        %v957 = vld [vmem:[%s255 + $0x7e8] sm:$0xf]
        %v958 = vld [vmem:[%s255 + $0x7ec] sm:$0xf]
        %v959 = vld [vmem:[%s255 + $0x7f0] sm:$0xf]
        %v960 = vld [vmem:[%s255 + $0x7f4] sm:$0xf]
        %v961 = vld [vmem:[%s255 + $0x7f8] sm:$0xf]
        %v962 = vld [vmem:[%s255 + $0x7fc] sm:$0xf]
        %v1475 = vunpack.c.l.b16 %v451
        %v1476 = vunpack.c.l.b16 %v452
        %v1477 = vunpack.c.l.b16 %v453
        %v1478 = vunpack.c.l.b16 %v454
        %v1479 = vunpack.c.l.b16 %v455
        %v1480 = vunpack.c.l.b16 %v456
        %v1481 = vunpack.c.l.b16 %v457
        %v1482 = vunpack.c.l.b16 %v458
        %v1483 = vunpack.c.l.b16 %v459
        %v1484 = vunpack.c.l.b16 %v460
        %v1485 = vunpack.c.l.b16 %v461
        %v1486 = vunpack.c.l.b16 %v462
        %v1487 = vunpack.c.l.b16 %v463
        %v1488 = vunpack.c.l.b16 %v464
        %v1489 = vunpack.c.l.b16 %v465
        %v1490 = vunpack.c.l.b16 %v466
        %v1491 = vunpack.c.l.b16 %v467
        %v1492 = vunpack.c.l.b16 %v468
        %v1493 = vunpack.c.l.b16 %v469
        %v1494 = vunpack.c.l.b16 %v470
        %v1495 = vunpack.c.l.b16 %v471
        %v1496 = vunpack.c.l.b16 %v472
        %v1497 = vunpack.c.l.b16 %v473
        %v1498 = vunpack.c.l.b16 %v474
        %v1499 = vunpack.c.l.b16 %v475
        %v1500 = vunpack.c.l.b16 %v476
        %v1501 = vunpack.c.l.b16 %v477
        %v1502 = vunpack.c.l.b16 %v478
        %v1503 = vunpack.c.l.b16 %v479
        %v1504 = vunpack.c.l.b16 %v480
        %v1505 = vunpack.c.l.b16 %v481
        %v1506 = vunpack.c.l.b16 %v482
        %v1507 = vunpack.c.l.b16 %v483
        %v1508 = vunpack.c.l.b16 %v484
        %v1509 = vunpack.c.l.b16 %v485
        %v1510 = vunpack.c.l.b16 %v486
        %v1511 = vunpack.c.l.b16 %v487
        %v1512 = vunpack.c.l.b16 %v488
        %v1513 = vunpack.c.l.b16 %v489
        %v1514 = vunpack.c.l.b16 %v490
        %v1515 = vunpack.c.l.b16 %v491
        %v1516 = vunpack.c.l.b16 %v492
        %v1517 = vunpack.c.l.b16 %v493
        %v1518 = vunpack.c.l.b16 %v494
        %v1519 = vunpack.c.l.b16 %v495
        %v1520 = vunpack.c.l.b16 %v496
        %v1521 = vunpack.c.l.b16 %v497
        %v1522 = vunpack.c.l.b16 %v498
        %v1523 = vunpack.c.l.b16 %v499
        %v1524 = vunpack.c.l.b16 %v500
        %v1525 = vunpack.c.l.b16 %v501
        %v1526 = vunpack.c.l.b16 %v502
        %v1527 = vunpack.c.l.b16 %v503
        %v1528 = vunpack.c.l.b16 %v504
        %v1529 = vunpack.c.l.b16 %v505
        %v1530 = vunpack.c.l.b16 %v506
        %v1531 = vunpack.c.l.b16 %v507
        %v1532 = vunpack.c.l.b16 %v508
        %v1533 = vunpack.c.l.b16 %v509
        %v1534 = vunpack.c.l.b16 %v510
        %v1535 = vunpack.c.l.b16 %v511
        %v1536 = vunpack.c.l.b16 %v512
        %v1537 = vunpack.c.l.b16 %v513
        %v1538 = vunpack.c.l.b16 %v514
        %v1539 = vunpack.c.l.b16 %v515
        %v1540 = vunpack.c.l.b16 %v516
        %v1541 = vunpack.c.l.b16 %v517
        %v1542 = vunpack.c.l.b16 %v518
        %v1543 = vunpack.c.l.b16 %v519
        %v1544 = vunpack.c.l.b16 %v520
        %v1545 = vunpack.c.l.b16 %v521
        %v1546 = vunpack.c.l.b16 %v522
        %v1547 = vunpack.c.l.b16 %v523
        %v1548 = vunpack.c.l.b16 %v524
        %v1549 = vunpack.c.l.b16 %v525
        %v1550 = vunpack.c.l.b16 %v526
        %v1551 = vunpack.c.l.b16 %v527
        %v1552 = vunpack.c.l.b16 %v528
        %v1553 = vunpack.c.l.b16 %v529
        %v1554 = vunpack.c.l.b16 %v530
        %v1555 = vunpack.c.l.b16 %v531
        %v1556 = vunpack.c.l.b16 %v532
        %v1557 = vunpack.c.l.b16 %v533
        %v1558 = vunpack.c.l.b16 %v534
        %v1559 = vunpack.c.l.b16 %v535
        %v1560 = vunpack.c.l.b16 %v536
        %v1561 = vunpack.c.l.b16 %v537
        %v1562 = vunpack.c.l.b16 %v538
        %v1563 = vunpack.c.l.b16 %v539
        %v1564 = vunpack.c.l.b16 %v540
        %v1565 = vunpack.c.l.b16 %v541
        %v1566 = vunpack.c.l.b16 %v542
        %v1567 = vunpack.c.l.b16 %v543
        %v1568 = vunpack.c.l.b16 %v544
        %v1569 = vunpack.c.l.b16 %v545
        %v1570 = vunpack.c.l.b16 %v546
        %v1571 = vunpack.c.l.b16 %v547
        %v1572 = vunpack.c.l.b16 %v548
        %v1573 = vunpack.c.l.b16 %v549
        %v1574 = vunpack.c.l.b16 %v550
        %v1575 = vunpack.c.l.b16 %v551
        %v1576 = vunpack.c.l.b16 %v552
        %v1577 = vunpack.c.l.b16 %v553
        %v1578 = vunpack.c.l.b16 %v554
        %v1579 = vunpack.c.l.b16 %v555
        %v1580 = vunpack.c.l.b16 %v556
        %v1581 = vunpack.c.l.b16 %v557
        %v1582 = vunpack.c.l.b16 %v558
        %v1583 = vunpack.c.l.b16 %v559
        %v1584 = vunpack.c.l.b16 %v560
        %v1585 = vunpack.c.l.b16 %v561
        %v1586 = vunpack.c.l.b16 %v562
        %v1587 = vunpack.c.l.b16 %v563
        %v1588 = vunpack.c.l.b16 %v564
        %v1589 = vunpack.c.l.b16 %v565
        %v1590 = vunpack.c.l.b16 %v566
        %v1591 = vunpack.c.l.b16 %v567
        %v1592 = vunpack.c.l.b16 %v568
        %v1593 = vunpack.c.l.b16 %v569
        %v1594 = vunpack.c.l.b16 %v570
        %v1595 = vunpack.c.l.b16 %v571
        %v1596 = vunpack.c.l.b16 %v572
        %v1597 = vunpack.c.l.b16 %v573
        %v1598 = vunpack.c.l.b16 %v574
        %v1599 = vunpack.c.l.b16 %v575
        %v1600 = vunpack.c.l.b16 %v576
        %v1601 = vunpack.c.l.b16 %v577
        %v1602 = vunpack.c.l.b16 %v578
        %v1603 = vunpack.c.l.b16 %v579
        %v1604 = vunpack.c.l.b16 %v580
        %v1605 = vunpack.c.l.b16 %v581
        %v1606 = vunpack.c.l.b16 %v582
        %v1607 = vunpack.c.l.b16 %v583
        %v1608 = vunpack.c.l.b16 %v584
        %v1609 = vunpack.c.l.b16 %v585
        %v1610 = vunpack.c.l.b16 %v586
        %v1611 = vunpack.c.l.b16 %v587
        %v1612 = vunpack.c.l.b16 %v588
        %v1613 = vunpack.c.l.b16 %v589
        %v1614 = vunpack.c.l.b16 %v590
        %v1615 = vunpack.c.l.b16 %v591
        %v1616 = vunpack.c.l.b16 %v592
        %v1617 = vunpack.c.l.b16 %v593
        %v1618 = vunpack.c.l.b16 %v594
        %v1619 = vunpack.c.l.b16 %v595
        %v1620 = vunpack.c.l.b16 %v596
        %v1621 = vunpack.c.l.b16 %v597
        %v1622 = vunpack.c.l.b16 %v598
        %v1623 = vunpack.c.l.b16 %v599
        %v1624 = vunpack.c.l.b16 %v600
        %v1625 = vunpack.c.l.b16 %v601
        %v1626 = vunpack.c.l.b16 %v602
        %v1627 = vunpack.c.l.b16 %v603
        %v1628 = vunpack.c.l.b16 %v604
        %v1629 = vunpack.c.l.b16 %v605
        %v1630 = vunpack.c.l.b16 %v606
        %v1631 = vunpack.c.l.b16 %v607
        %v1632 = vunpack.c.l.b16 %v608
        %v1633 = vunpack.c.l.b16 %v609
        %v1634 = vunpack.c.l.b16 %v610
        %v1635 = vunpack.c.l.b16 %v611
        %v1636 = vunpack.c.l.b16 %v612
        %v1637 = vunpack.c.l.b16 %v613
        %v1638 = vunpack.c.l.b16 %v614
        %v1639 = vunpack.c.l.b16 %v615
        %v1640 = vunpack.c.l.b16 %v616
        %v1641 = vunpack.c.l.b16 %v617
        %v1642 = vunpack.c.l.b16 %v618
        %v1643 = vunpack.c.l.b16 %v619
        %v1644 = vunpack.c.l.b16 %v620
        %v1645 = vunpack.c.l.b16 %v621
        %v1646 = vunpack.c.l.b16 %v622
        %v1647 = vunpack.c.l.b16 %v623
        %v1648 = vunpack.c.l.b16 %v624
        %v1649 = vunpack.c.l.b16 %v625
        %v1650 = vunpack.c.l.b16 %v626
        %v1651 = vunpack.c.l.b16 %v627
        %v1652 = vunpack.c.l.b16 %v628
        %v1653 = vunpack.c.l.b16 %v629
        %v1654 = vunpack.c.l.b16 %v630
        %v1655 = vunpack.c.l.b16 %v631
        %v1656 = vunpack.c.l.b16 %v632
        %v1657 = vunpack.c.l.b16 %v633
        %v1658 = vunpack.c.l.b16 %v634
        %v1659 = vunpack.c.l.b16 %v635
        %v1660 = vunpack.c.l.b16 %v636
        %v1661 = vunpack.c.l.b16 %v637
        %v1662 = vunpack.c.l.b16 %v638
        %v1663 = vunpack.c.l.b16 %v639
        %v1664 = vunpack.c.l.b16 %v640
        %v1665 = vunpack.c.l.b16 %v641
        %v1666 = vunpack.c.l.b16 %v642
        %v1667 = vunpack.c.l.b16 %v643
        %v1668 = vunpack.c.l.b16 %v644
        %v1669 = vunpack.c.l.b16 %v645
        %v1670 = vunpack.c.l.b16 %v646
        %v1671 = vunpack.c.l.b16 %v647
        %v1672 = vunpack.c.l.b16 %v648
        %v1673 = vunpack.c.l.b16 %v649
        %v1674 = vunpack.c.l.b16 %v650
        %v1675 = vunpack.c.l.b16 %v651
        %v1676 = vunpack.c.l.b16 %v652
        %v1677 = vunpack.c.l.b16 %v653
        %v1678 = vunpack.c.l.b16 %v654
        %v1679 = vunpack.c.l.b16 %v655
        %v1680 = vunpack.c.l.b16 %v656
        %v1681 = vunpack.c.l.b16 %v657
        %v1682 = vunpack.c.l.b16 %v658
        %v1683 = vunpack.c.l.b16 %v659
        %v1684 = vunpack.c.l.b16 %v660
        %v1685 = vunpack.c.l.b16 %v661
        %v1686 = vunpack.c.l.b16 %v662
        %v1687 = vunpack.c.l.b16 %v663
        %v1688 = vunpack.c.l.b16 %v664
        %v1689 = vunpack.c.l.b16 %v665
        %v1690 = vunpack.c.l.b16 %v666
        %v1691 = vunpack.c.l.b16 %v667
        %v1692 = vunpack.c.l.b16 %v668
        %v1693 = vunpack.c.l.b16 %v669
        %v1694 = vunpack.c.l.b16 %v670
        %v1695 = vunpack.c.l.b16 %v671
        %v1696 = vunpack.c.l.b16 %v672
        %v1697 = vunpack.c.l.b16 %v673
        %v1698 = vunpack.c.l.b16 %v674
        %v1699 = vunpack.c.l.b16 %v675
        %v1700 = vunpack.c.l.b16 %v676
        %v1701 = vunpack.c.l.b16 %v677
        %v1702 = vunpack.c.l.b16 %v678
        %v1703 = vunpack.c.l.b16 %v679
        %v1704 = vunpack.c.l.b16 %v680
        %v1705 = vunpack.c.l.b16 %v681
        %v1706 = vunpack.c.l.b16 %v682
        %v1707 = vunpack.c.l.b16 %v683
        %v1708 = vunpack.c.l.b16 %v684
        %v1709 = vunpack.c.l.b16 %v685
        %v1710 = vunpack.c.l.b16 %v686
        %v1711 = vunpack.c.l.b16 %v687
        %v1712 = vunpack.c.l.b16 %v688
        %v1713 = vunpack.c.l.b16 %v689
        %v1714 = vunpack.c.l.b16 %v690
        %v1715 = vunpack.c.l.b16 %v691
        %v1716 = vunpack.c.l.b16 %v692
        %v1717 = vunpack.c.l.b16 %v693
        %v1718 = vunpack.c.l.b16 %v694
        %v1719 = vunpack.c.l.b16 %v695
        %v1720 = vunpack.c.l.b16 %v696
        %v1721 = vunpack.c.l.b16 %v697
        %v1722 = vunpack.c.l.b16 %v698
        %v1723 = vunpack.c.l.b16 %v699
        %v1724 = vunpack.c.l.b16 %v700
        %v1725 = vunpack.c.l.b16 %v701
        %v1726 = vunpack.c.l.b16 %v702
        %v1727 = vunpack.c.l.b16 %v703
        %v1728 = vunpack.c.l.b16 %v704
        %v1729 = vunpack.c.l.b16 %v705
        %v1730 = vunpack.c.l.b16 %v706
        %v1731 = vunpack.c.l.b16 %v707
        %v1732 = vunpack.c.l.b16 %v708
        %v1733 = vunpack.c.l.b16 %v709
        %v1734 = vunpack.c.l.b16 %v710
        %v1735 = vunpack.c.l.b16 %v711
        %v1736 = vunpack.c.l.b16 %v712
        %v1737 = vunpack.c.l.b16 %v713
        %v1738 = vunpack.c.l.b16 %v714
        %v1739 = vunpack.c.l.b16 %v715
        %v1740 = vunpack.c.l.b16 %v716
        %v1741 = vunpack.c.l.b16 %v717
        %v1742 = vunpack.c.l.b16 %v718
        %v1743 = vunpack.c.l.b16 %v719
        %v1744 = vunpack.c.l.b16 %v720
        %v1745 = vunpack.c.l.b16 %v721
        %v1746 = vunpack.c.l.b16 %v722
        %v1747 = vunpack.c.l.b16 %v723
        %v1748 = vunpack.c.l.b16 %v724
        %v1749 = vunpack.c.l.b16 %v725
        %v1750 = vunpack.c.l.b16 %v726
        %v1751 = vunpack.c.l.b16 %v727
        %v1752 = vunpack.c.l.b16 %v728
        %v1753 = vunpack.c.l.b16 %v729
        %v1754 = vunpack.c.l.b16 %v730
        %v1755 = vunpack.c.l.b16 %v731
        %v1756 = vunpack.c.l.b16 %v732
        %v1757 = vunpack.c.l.b16 %v733
        %v1758 = vunpack.c.l.b16 %v734
        %v1759 = vunpack.c.l.b16 %v735
        %v1760 = vunpack.c.l.b16 %v736
        %v1761 = vunpack.c.l.b16 %v737
        %v1762 = vunpack.c.l.b16 %v738
        %v1763 = vunpack.c.l.b16 %v739
        %v1764 = vunpack.c.l.b16 %v740
        %v1765 = vunpack.c.l.b16 %v741
        %v1766 = vunpack.c.l.b16 %v742
        %v1767 = vunpack.c.l.b16 %v743
        %v1768 = vunpack.c.l.b16 %v744
        %v1769 = vunpack.c.l.b16 %v745
        %v1770 = vunpack.c.l.b16 %v746
        %v1771 = vunpack.c.l.b16 %v747
        %v1772 = vunpack.c.l.b16 %v748
        %v1773 = vunpack.c.l.b16 %v749
        %v1774 = vunpack.c.l.b16 %v750
        %v1775 = vunpack.c.l.b16 %v751
        %v1776 = vunpack.c.l.b16 %v752
        %v1777 = vunpack.c.l.b16 %v753
        %v1778 = vunpack.c.l.b16 %v754
        %v1779 = vunpack.c.l.b16 %v755
        %v1780 = vunpack.c.l.b16 %v756
        %v1781 = vunpack.c.l.b16 %v757
        %v1782 = vunpack.c.l.b16 %v758
        %v1783 = vunpack.c.l.b16 %v759
        %v1784 = vunpack.c.l.b16 %v760
        %v1785 = vunpack.c.l.b16 %v761
        %v1786 = vunpack.c.l.b16 %v762
        %v1787 = vunpack.c.l.b16 %v763
        %v1788 = vunpack.c.l.b16 %v764
        %v1789 = vunpack.c.l.b16 %v765
        %v1790 = vunpack.c.l.b16 %v766
        %v1791 = vunpack.c.l.b16 %v767
        %v1792 = vunpack.c.l.b16 %v768
        %v1793 = vunpack.c.l.b16 %v769
        %v1794 = vunpack.c.l.b16 %v770
        %v1795 = vunpack.c.l.b16 %v771
        %v1796 = vunpack.c.l.b16 %v772
        %v1797 = vunpack.c.l.b16 %v773
        %v1798 = vunpack.c.l.b16 %v774
        %v1799 = vunpack.c.l.b16 %v775
        %v1800 = vunpack.c.l.b16 %v776
        %v1801 = vunpack.c.l.b16 %v777
        %v1802 = vunpack.c.l.b16 %v778
        %v1803 = vunpack.c.l.b16 %v779
        %v1804 = vunpack.c.l.b16 %v780
        %v1805 = vunpack.c.l.b16 %v781
        %v1806 = vunpack.c.l.b16 %v782
        %v1807 = vunpack.c.l.b16 %v783
        %v1808 = vunpack.c.l.b16 %v784
        %v1809 = vunpack.c.l.b16 %v785
        %v1810 = vunpack.c.l.b16 %v786
        %v1811 = vunpack.c.l.b16 %v787
        %v1812 = vunpack.c.l.b16 %v788
        %v1813 = vunpack.c.l.b16 %v789
        %v1814 = vunpack.c.l.b16 %v790
        %v1815 = vunpack.c.l.b16 %v791
        %v1816 = vunpack.c.l.b16 %v792
        %v1817 = vunpack.c.l.b16 %v793
        %v1818 = vunpack.c.l.b16 %v794
        %v1819 = vunpack.c.l.b16 %v795
        %v1820 = vunpack.c.l.b16 %v796
        %v1821 = vunpack.c.l.b16 %v797
        %v1822 = vunpack.c.l.b16 %v798
        %v1823 = vunpack.c.l.b16 %v799
        %v1824 = vunpack.c.l.b16 %v800
        %v1825 = vunpack.c.l.b16 %v801
        %v1826 = vunpack.c.l.b16 %v802
        %v1827 = vunpack.c.l.b16 %v803
        %v1828 = vunpack.c.l.b16 %v804
        %v1829 = vunpack.c.l.b16 %v805
        %v1830 = vunpack.c.l.b16 %v806
        %v1831 = vunpack.c.l.b16 %v807
        %v1832 = vunpack.c.l.b16 %v808
        %v1833 = vunpack.c.l.b16 %v809
        %v1834 = vunpack.c.l.b16 %v810
        %v1835 = vunpack.c.l.b16 %v811
        %v1836 = vunpack.c.l.b16 %v812
        %v1837 = vunpack.c.l.b16 %v813
        %v1838 = vunpack.c.l.b16 %v814
        %v1839 = vunpack.c.l.b16 %v815
        %v1840 = vunpack.c.l.b16 %v816
        %v1841 = vunpack.c.l.b16 %v817
        %v1842 = vunpack.c.l.b16 %v818
        %v1843 = vunpack.c.l.b16 %v819
        %v1844 = vunpack.c.l.b16 %v820
        %v1845 = vunpack.c.l.b16 %v821
        %v1846 = vunpack.c.l.b16 %v822
        %v1847 = vunpack.c.l.b16 %v823
        %v1848 = vunpack.c.l.b16 %v824
        %v1849 = vunpack.c.l.b16 %v825
        %v1850 = vunpack.c.l.b16 %v826
        %v1851 = vunpack.c.l.b16 %v827
        %v1852 = vunpack.c.l.b16 %v828
        %v1853 = vunpack.c.l.b16 %v829
        %v1854 = vunpack.c.l.b16 %v830
        %v1855 = vunpack.c.l.b16 %v831
        %v1856 = vunpack.c.l.b16 %v832
        %v1857 = vunpack.c.l.b16 %v833
        %v1858 = vunpack.c.l.b16 %v834
        %v1859 = vunpack.c.l.b16 %v835
        %v1860 = vunpack.c.l.b16 %v836
        %v1861 = vunpack.c.l.b16 %v837
        %v1862 = vunpack.c.l.b16 %v838
        %v1863 = vunpack.c.l.b16 %v839
        %v1864 = vunpack.c.l.b16 %v840
        %v1865 = vunpack.c.l.b16 %v841
        %v1866 = vunpack.c.l.b16 %v842
        %v1867 = vunpack.c.l.b16 %v843
        %v1868 = vunpack.c.l.b16 %v844
        %v1869 = vunpack.c.l.b16 %v845
        %v1870 = vunpack.c.l.b16 %v846
        %v1871 = vunpack.c.l.b16 %v847
        %v1872 = vunpack.c.l.b16 %v848
        %v1873 = vunpack.c.l.b16 %v849
        %v1874 = vunpack.c.l.b16 %v850
        %v1875 = vunpack.c.l.b16 %v851
        %v1876 = vunpack.c.l.b16 %v852
        %v1877 = vunpack.c.l.b16 %v853
        %v1878 = vunpack.c.l.b16 %v854
        %v1879 = vunpack.c.l.b16 %v855
        %v1880 = vunpack.c.l.b16 %v856
        %v1881 = vunpack.c.l.b16 %v857
        %v1882 = vunpack.c.l.b16 %v858
        %v1883 = vunpack.c.l.b16 %v859
        %v1884 = vunpack.c.l.b16 %v860
        %v1885 = vunpack.c.l.b16 %v861
        %v1886 = vunpack.c.l.b16 %v862
        %v1887 = vunpack.c.l.b16 %v863
        %v1888 = vunpack.c.l.b16 %v864
        %v1889 = vunpack.c.l.b16 %v865
        %v1890 = vunpack.c.l.b16 %v866
        %v1891 = vunpack.c.l.b16 %v867
        %v1892 = vunpack.c.l.b16 %v868
        %v1893 = vunpack.c.l.b16 %v869
        %v1894 = vunpack.c.l.b16 %v870
        %v1895 = vunpack.c.l.b16 %v871
        %v1896 = vunpack.c.l.b16 %v872
        %v1897 = vunpack.c.l.b16 %v873
        %v1898 = vunpack.c.l.b16 %v874
        %v1899 = vunpack.c.l.b16 %v875
        %v1900 = vunpack.c.l.b16 %v876
        %v1901 = vunpack.c.l.b16 %v877
        %v1902 = vunpack.c.l.b16 %v878
        %v1903 = vunpack.c.l.b16 %v879
        %v1904 = vunpack.c.l.b16 %v880
        %v1905 = vunpack.c.l.b16 %v881
        %v1906 = vunpack.c.l.b16 %v882
        %v1907 = vunpack.c.l.b16 %v883
        %v1908 = vunpack.c.l.b16 %v884
        %v1909 = vunpack.c.l.b16 %v885
        %v1910 = vunpack.c.l.b16 %v886
        %v1911 = vunpack.c.l.b16 %v887
        %v1912 = vunpack.c.l.b16 %v888
        %v1913 = vunpack.c.l.b16 %v889
        %v1914 = vunpack.c.l.b16 %v890
        %v1915 = vunpack.c.l.b16 %v891
        %v1916 = vunpack.c.l.b16 %v892
        %v1917 = vunpack.c.l.b16 %v893
        %v1918 = vunpack.c.l.b16 %v894
        %v1919 = vunpack.c.l.b16 %v895
        %v1920 = vunpack.c.l.b16 %v896
        %v1921 = vunpack.c.l.b16 %v897
        %v1922 = vunpack.c.l.b16 %v898
        %v1923 = vunpack.c.l.b16 %v899
        %v1924 = vunpack.c.l.b16 %v900
        %v1925 = vunpack.c.l.b16 %v901
        %v1926 = vunpack.c.l.b16 %v902
        %v1927 = vunpack.c.l.b16 %v903
        %v1928 = vunpack.c.l.b16 %v904
        %v1929 = vunpack.c.l.b16 %v905
        %v1930 = vunpack.c.l.b16 %v906
        %v1931 = vunpack.c.l.b16 %v907
        %v1932 = vunpack.c.l.b16 %v908
        %v1933 = vunpack.c.l.b16 %v909
        %v1934 = vunpack.c.l.b16 %v910
        %v1935 = vunpack.c.l.b16 %v911
        %v1936 = vunpack.c.l.b16 %v912
        %v1937 = vunpack.c.l.b16 %v913
        %v1938 = vunpack.c.l.b16 %v914
        %v1939 = vunpack.c.l.b16 %v915
        %v1940 = vunpack.c.l.b16 %v916
        %v1941 = vunpack.c.l.b16 %v917
        %v1942 = vunpack.c.l.b16 %v918
        %v1943 = vunpack.c.l.b16 %v919
        %v1944 = vunpack.c.l.b16 %v920
        %v1945 = vunpack.c.l.b16 %v921
        %v1946 = vunpack.c.l.b16 %v922
        %v1947 = vunpack.c.l.b16 %v923
        %v1948 = vunpack.c.l.b16 %v924
        %v1949 = vunpack.c.l.b16 %v925
        %v1950 = vunpack.c.l.b16 %v926
        %v1951 = vunpack.c.l.b16 %v927
        %v1952 = vunpack.c.l.b16 %v928
        %v1953 = vunpack.c.l.b16 %v929
        %v1954 = vunpack.c.l.b16 %v930
        %v1955 = vunpack.c.l.b16 %v931
        %v1956 = vunpack.c.l.b16 %v932
        %v1957 = vunpack.c.l.b16 %v933
        %v1958 = vunpack.c.l.b16 %v934
        %v1959 = vunpack.c.l.b16 %v935
        %v1960 = vunpack.c.l.b16 %v936
        %v1961 = vunpack.c.l.b16 %v937
        %v1962 = vunpack.c.l.b16 %v938
        %v1963 = vunpack.c.l.b16 %v939
        %v1964 = vunpack.c.l.b16 %v940
        %v1965 = vunpack.c.l.b16 %v941
        %v1966 = vunpack.c.l.b16 %v942
        %v1967 = vunpack.c.l.b16 %v943
        %v1968 = vunpack.c.l.b16 %v944
        %v1969 = vunpack.c.l.b16 %v945
        %v1970 = vunpack.c.l.b16 %v946
        %v1971 = vunpack.c.l.b16 %v947
        %v1972 = vunpack.c.l.b16 %v948
        %v1973 = vunpack.c.l.b16 %v949
        %v1974 = vunpack.c.l.b16 %v950
        %v1975 = vunpack.c.l.b16 %v951
        %v1976 = vunpack.c.l.b16 %v952
        %v1977 = vunpack.c.l.b16 %v953
        %v1978 = vunpack.c.l.b16 %v954
        %v1979 = vunpack.c.l.b16 %v955
        %v1980 = vunpack.c.l.b16 %v956
        %v1981 = vunpack.c.l.b16 %v957
        %v1982 = vunpack.c.l.b16 %v958
        %v1983 = vunpack.c.l.b16 %v959
        %v1984 = vunpack.c.l.b16 %v960
        %v1985 = vunpack.c.l.b16 %v961
        %v1986 = vunpack.c.l.b16 %v962
        %v1987 = vpack.c.b16 %v1476, %v1475
        %v1988 = vpack.c.b16 %v1478, %v1477
        %v1989 = vpack.c.b16 %v1480, %v1479
        %v1990 = vpack.c.b16 %v1482, %v1481
        %v1991 = vpack.c.b16 %v1484, %v1483
        %v1992 = vpack.c.b16 %v1486, %v1485
        %v1993 = vpack.c.b16 %v1488, %v1487
        %v1994 = vpack.c.b16 %v1490, %v1489
        %v1995 = vpack.c.b16 %v1492, %v1491
        %v1996 = vpack.c.b16 %v1494, %v1493
        %v1997 = vpack.c.b16 %v1496, %v1495
        %v1998 = vpack.c.b16 %v1498, %v1497
        %v1999 = vpack.c.b16 %v1500, %v1499
        %v2000 = vpack.c.b16 %v1502, %v1501
        %v2001 = vpack.c.b16 %v1504, %v1503
        %v2002 = vpack.c.b16 %v1506, %v1505
        %v2003 = vpack.c.b16 %v1508, %v1507
        %v2004 = vpack.c.b16 %v1510, %v1509
        %v2005 = vpack.c.b16 %v1512, %v1511
        %v2006 = vpack.c.b16 %v1514, %v1513
        %v2007 = vpack.c.b16 %v1516, %v1515
        %v2008 = vpack.c.b16 %v1518, %v1517
        %v2009 = vpack.c.b16 %v1520, %v1519
        %v2010 = vpack.c.b16 %v1522, %v1521
        %v2011 = vpack.c.b16 %v1524, %v1523
        %v2012 = vpack.c.b16 %v1526, %v1525
        %v2013 = vpack.c.b16 %v1528, %v1527
        %v2014 = vpack.c.b16 %v1530, %v1529
        %v2015 = vpack.c.b16 %v1532, %v1531
        %v2016 = vpack.c.b16 %v1534, %v1533
        %v2017 = vpack.c.b16 %v1536, %v1535
        %v2018 = vpack.c.b16 %v1538, %v1537
        %v2019 = vpack.c.b16 %v1540, %v1539
        %v2020 = vpack.c.b16 %v1542, %v1541
        %v2021 = vpack.c.b16 %v1544, %v1543
        %v2022 = vpack.c.b16 %v1546, %v1545
        %v2023 = vpack.c.b16 %v1548, %v1547
        %v2024 = vpack.c.b16 %v1550, %v1549
        %v2025 = vpack.c.b16 %v1552, %v1551
        %v2026 = vpack.c.b16 %v1554, %v1553
        %v2027 = vpack.c.b16 %v1556, %v1555
        %v2028 = vpack.c.b16 %v1558, %v1557
        %v2029 = vpack.c.b16 %v1560, %v1559
        %v2030 = vpack.c.b16 %v1562, %v1561
        %v2031 = vpack.c.b16 %v1564, %v1563
        %v2032 = vpack.c.b16 %v1566, %v1565
        %v2033 = vpack.c.b16 %v1568, %v1567
        %v2034 = vpack.c.b16 %v1570, %v1569
        %v2035 = vpack.c.b16 %v1572, %v1571
        %v2036 = vpack.c.b16 %v1574, %v1573
        %v2037 = vpack.c.b16 %v1576, %v1575
        %v2038 = vpack.c.b16 %v1578, %v1577
        %v2039 = vpack.c.b16 %v1580, %v1579
        %v2040 = vpack.c.b16 %v1582, %v1581
        %v2041 = vpack.c.b16 %v1584, %v1583
        %v2042 = vpack.c.b16 %v1586, %v1585
        %v2043 = vpack.c.b16 %v1588, %v1587
        %v2044 = vpack.c.b16 %v1590, %v1589
        %v2045 = vpack.c.b16 %v1592, %v1591
        %v2046 = vpack.c.b16 %v1594, %v1593
        %v2047 = vpack.c.b16 %v1596, %v1595
        %v2048 = vpack.c.b16 %v1598, %v1597
        %v2049 = vpack.c.b16 %v1600, %v1599
        %v2050 = vpack.c.b16 %v1602, %v1601
        %v2051 = vpack.c.b16 %v1604, %v1603
        %v2052 = vpack.c.b16 %v1606, %v1605
        %v2053 = vpack.c.b16 %v1608, %v1607
        %v2054 = vpack.c.b16 %v1610, %v1609
        %v2055 = vpack.c.b16 %v1612, %v1611
        %v2056 = vpack.c.b16 %v1614, %v1613
        %v2057 = vpack.c.b16 %v1616, %v1615
        %v2058 = vpack.c.b16 %v1618, %v1617
        %v2059 = vpack.c.b16 %v1620, %v1619
        %v2060 = vpack.c.b16 %v1622, %v1621
        %v2061 = vpack.c.b16 %v1624, %v1623
        %v2062 = vpack.c.b16 %v1626, %v1625
        %v2063 = vpack.c.b16 %v1628, %v1627
        %v2064 = vpack.c.b16 %v1630, %v1629
        %v2065 = vpack.c.b16 %v1632, %v1631
        %v2066 = vpack.c.b16 %v1634, %v1633
        %v2067 = vpack.c.b16 %v1636, %v1635
        %v2068 = vpack.c.b16 %v1638, %v1637
        %v2069 = vpack.c.b16 %v1640, %v1639
        %v2070 = vpack.c.b16 %v1642, %v1641
        %v2071 = vpack.c.b16 %v1644, %v1643
        %v2072 = vpack.c.b16 %v1646, %v1645
        %v2073 = vpack.c.b16 %v1648, %v1647
        %v2074 = vpack.c.b16 %v1650, %v1649
        %v2075 = vpack.c.b16 %v1652, %v1651
        %v2076 = vpack.c.b16 %v1654, %v1653
        %v2077 = vpack.c.b16 %v1656, %v1655
        %v2078 = vpack.c.b16 %v1658, %v1657
        %v2079 = vpack.c.b16 %v1660, %v1659
        %v2080 = vpack.c.b16 %v1662, %v1661
        %v2081 = vpack.c.b16 %v1664, %v1663
        %v2082 = vpack.c.b16 %v1666, %v1665
        %v2083 = vpack.c.b16 %v1668, %v1667
        %v2084 = vpack.c.b16 %v1670, %v1669
        %v2085 = vpack.c.b16 %v1672, %v1671
        %v2086 = vpack.c.b16 %v1674, %v1673
        %v2087 = vpack.c.b16 %v1676, %v1675
        %v2088 = vpack.c.b16 %v1678, %v1677
        %v2089 = vpack.c.b16 %v1680, %v1679
        %v2090 = vpack.c.b16 %v1682, %v1681
        %v2091 = vpack.c.b16 %v1684, %v1683
        %v2092 = vpack.c.b16 %v1686, %v1685
        %v2093 = vpack.c.b16 %v1688, %v1687
        %v2094 = vpack.c.b16 %v1690, %v1689
        %v2095 = vpack.c.b16 %v1692, %v1691
        %v2096 = vpack.c.b16 %v1694, %v1693
        %v2097 = vpack.c.b16 %v1696, %v1695
        %v2098 = vpack.c.b16 %v1698, %v1697
        %v2099 = vpack.c.b16 %v1700, %v1699
        %v2100 = vpack.c.b16 %v1702, %v1701
        %v2101 = vpack.c.b16 %v1704, %v1703
        %v2102 = vpack.c.b16 %v1706, %v1705
        %v2103 = vpack.c.b16 %v1708, %v1707
        %v2104 = vpack.c.b16 %v1710, %v1709
        %v2105 = vpack.c.b16 %v1712, %v1711
        %v2106 = vpack.c.b16 %v1714, %v1713
        %v2107 = vpack.c.b16 %v1716, %v1715
        %v2108 = vpack.c.b16 %v1718, %v1717
        %v2109 = vpack.c.b16 %v1720, %v1719
        %v2110 = vpack.c.b16 %v1722, %v1721
        %v2111 = vpack.c.b16 %v1724, %v1723
        %v2112 = vpack.c.b16 %v1726, %v1725
        %v2113 = vpack.c.b16 %v1728, %v1727
        %v2114 = vpack.c.b16 %v1730, %v1729
        %v2115 = vpack.c.b16 %v1732, %v1731
        %v2116 = vpack.c.b16 %v1734, %v1733
        %v2117 = vpack.c.b16 %v1736, %v1735
        %v2118 = vpack.c.b16 %v1738, %v1737
        %v2119 = vpack.c.b16 %v1740, %v1739
        %v2120 = vpack.c.b16 %v1742, %v1741
        %v2121 = vpack.c.b16 %v1744, %v1743
        %v2122 = vpack.c.b16 %v1746, %v1745
        %v2123 = vpack.c.b16 %v1748, %v1747
        %v2124 = vpack.c.b16 %v1750, %v1749
        %v2125 = vpack.c.b16 %v1752, %v1751
        %v2126 = vpack.c.b16 %v1754, %v1753
        %v2127 = vpack.c.b16 %v1756, %v1755
        %v2128 = vpack.c.b16 %v1758, %v1757
        %v2129 = vpack.c.b16 %v1760, %v1759
        %v2130 = vpack.c.b16 %v1762, %v1761
        %v2131 = vpack.c.b16 %v1764, %v1763
        %v2132 = vpack.c.b16 %v1766, %v1765
        %v2133 = vpack.c.b16 %v1768, %v1767
        %v2134 = vpack.c.b16 %v1770, %v1769
        %v2135 = vpack.c.b16 %v1772, %v1771
        %v2136 = vpack.c.b16 %v1774, %v1773
        %v2137 = vpack.c.b16 %v1776, %v1775
        %v2138 = vpack.c.b16 %v1778, %v1777
        %v2139 = vpack.c.b16 %v1780, %v1779
        %v2140 = vpack.c.b16 %v1782, %v1781
        %v2141 = vpack.c.b16 %v1784, %v1783
        %v2142 = vpack.c.b16 %v1786, %v1785
        %v2143 = vpack.c.b16 %v1788, %v1787
        %v2144 = vpack.c.b16 %v1790, %v1789
        %v2145 = vpack.c.b16 %v1792, %v1791
        %v2146 = vpack.c.b16 %v1794, %v1793
        %v2147 = vpack.c.b16 %v1796, %v1795
        %v2148 = vpack.c.b16 %v1798, %v1797
        %v2149 = vpack.c.b16 %v1800, %v1799
        %v2150 = vpack.c.b16 %v1802, %v1801
        %v2151 = vpack.c.b16 %v1804, %v1803
        %v2152 = vpack.c.b16 %v1806, %v1805
        %v2153 = vpack.c.b16 %v1808, %v1807
        %v2154 = vpack.c.b16 %v1810, %v1809
        %v2155 = vpack.c.b16 %v1812, %v1811
        %v2156 = vpack.c.b16 %v1814, %v1813
        %v2157 = vpack.c.b16 %v1816, %v1815
        %v2158 = vpack.c.b16 %v1818, %v1817
        %v2159 = vpack.c.b16 %v1820, %v1819
        %v2160 = vpack.c.b16 %v1822, %v1821
        %v2161 = vpack.c.b16 %v1824, %v1823
        %v2162 = vpack.c.b16 %v1826, %v1825
        %v2163 = vpack.c.b16 %v1828, %v1827
        %v2164 = vpack.c.b16 %v1830, %v1829
        %v2165 = vpack.c.b16 %v1832, %v1831
        %v2166 = vpack.c.b16 %v1834, %v1833
        %v2167 = vpack.c.b16 %v1836, %v1835
        %v2168 = vpack.c.b16 %v1838, %v1837
        %v2169 = vpack.c.b16 %v1840, %v1839
        %v2170 = vpack.c.b16 %v1842, %v1841
        %v2171 = vpack.c.b16 %v1844, %v1843
        %v2172 = vpack.c.b16 %v1846, %v1845
        %v2173 = vpack.c.b16 %v1848, %v1847
        %v2174 = vpack.c.b16 %v1850, %v1849
        %v2175 = vpack.c.b16 %v1852, %v1851
        %v2176 = vpack.c.b16 %v1854, %v1853
        %v2177 = vpack.c.b16 %v1856, %v1855
        %v2178 = vpack.c.b16 %v1858, %v1857
        %v2179 = vpack.c.b16 %v1860, %v1859
        %v2180 = vpack.c.b16 %v1862, %v1861
        %v2181 = vpack.c.b16 %v1864, %v1863
        %v2182 = vpack.c.b16 %v1866, %v1865
        %v2183 = vpack.c.b16 %v1868, %v1867
        %v2184 = vpack.c.b16 %v1870, %v1869
        %v2185 = vpack.c.b16 %v1872, %v1871
        %v2186 = vpack.c.b16 %v1874, %v1873
        %v2187 = vpack.c.b16 %v1876, %v1875
        %v2188 = vpack.c.b16 %v1878, %v1877
        %v2189 = vpack.c.b16 %v1880, %v1879
        %v2190 = vpack.c.b16 %v1882, %v1881
        %v2191 = vpack.c.b16 %v1884, %v1883
        %v2192 = vpack.c.b16 %v1886, %v1885
        %v2193 = vpack.c.b16 %v1888, %v1887
        %v2194 = vpack.c.b16 %v1890, %v1889
        %v2195 = vpack.c.b16 %v1892, %v1891
        %v2196 = vpack.c.b16 %v1894, %v1893
        %v2197 = vpack.c.b16 %v1896, %v1895
        %v2198 = vpack.c.b16 %v1898, %v1897
        %v2199 = vpack.c.b16 %v1900, %v1899
        %v2200 = vpack.c.b16 %v1902, %v1901
        %v2201 = vpack.c.b16 %v1904, %v1903
        %v2202 = vpack.c.b16 %v1906, %v1905
        %v2203 = vpack.c.b16 %v1908, %v1907
        %v2204 = vpack.c.b16 %v1910, %v1909
        %v2205 = vpack.c.b16 %v1912, %v1911
        %v2206 = vpack.c.b16 %v1914, %v1913
        %v2207 = vpack.c.b16 %v1916, %v1915
        %v2208 = vpack.c.b16 %v1918, %v1917
        %v2209 = vpack.c.b16 %v1920, %v1919
        %v2210 = vpack.c.b16 %v1922, %v1921
        %v2211 = vpack.c.b16 %v1924, %v1923
        %v2212 = vpack.c.b16 %v1926, %v1925
        %v2213 = vpack.c.b16 %v1928, %v1927
        %v2214 = vpack.c.b16 %v1930, %v1929
        %v2215 = vpack.c.b16 %v1932, %v1931
        %v2216 = vpack.c.b16 %v1934, %v1933
        %v2217 = vpack.c.b16 %v1936, %v1935
        %v2218 = vpack.c.b16 %v1938, %v1937
        %v2219 = vpack.c.b16 %v1940, %v1939
        %v2220 = vpack.c.b16 %v1942, %v1941
        %v2221 = vpack.c.b16 %v1944, %v1943
        %v2222 = vpack.c.b16 %v1946, %v1945
        %v2223 = vpack.c.b16 %v1948, %v1947
        %v2224 = vpack.c.b16 %v1950, %v1949
        %v2225 = vpack.c.b16 %v1952, %v1951
        %v2226 = vpack.c.b16 %v1954, %v1953
        %v2227 = vpack.c.b16 %v1956, %v1955
        %v2228 = vpack.c.b16 %v1958, %v1957
        %v2229 = vpack.c.b16 %v1960, %v1959
        %v2230 = vpack.c.b16 %v1962, %v1961
        %v2231 = vpack.c.b16 %v1964, %v1963
        %v2232 = vpack.c.b16 %v1966, %v1965
        %v2233 = vpack.c.b16 %v1968, %v1967
        %v2234 = vpack.c.b16 %v1970, %v1969
        %v2235 = vpack.c.b16 %v1972, %v1971
        %v2236 = vpack.c.b16 %v1974, %v1973
        %v2237 = vpack.c.b16 %v1976, %v1975
        %v2238 = vpack.c.b16 %v1978, %v1977
        %v2239 = vpack.c.b16 %v1980, %v1979
        %v2240 = vpack.c.b16 %v1982, %v1981
        %v2241 = vpack.c.b16 %v1984, %v1983
        %v2242 = vpack.c.b16 %v1986, %v1985
        %2499 = vmatpush.bf16.msra.mxu0 %v1994
        %2500 = vmatpush.bf16.msra.mxu0 %v1993
        %2501 = vmatpush.bf16.msra.mxu0 %v1992
        %2502 = vmatpush.bf16.msra.mxu0 %v1991
        %2503 = vmatpush.bf16.msra.mxu0 %v1990
        %2504 = vmatpush.bf16.msra.mxu0 %v1989
        %2505 = vmatpush.bf16.msra.mxu0 %v1988
        %2506 = vmatpush.bf16.msra.mxu0 %v1987
        %2507 = vmatmul.bf16.gmra.mxu0 %v419
        %v2508 = vpop.f32.mrf.mxu0
        %v2509 = vadd.f32 0.0, %v2508
        %v2510 = vpop.f32.mrf.mxu0
        %2511 = vdwg.mxu0
        %2512 = vmatpush.bf16.msra.mxu0 %v2002
        %2513 = vmatpush.bf16.msra.mxu0 %v2001
        %2514 = vmatpush.bf16.msra.mxu0 %v2000
        %2515 = vmatpush.bf16.msra.mxu0 %v1999
        %2516 = vmatpush.bf16.msra.mxu0 %v1998
        %2517 = vmatpush.bf16.msra.mxu0 %v1997
        %2518 = vmatpush.bf16.msra.mxu0 %v1996
        %2519 = vmatpush.bf16.msra.mxu0 %v1995
        %2520 = vmatmul.bf16.gmra.mxu0 %v420
        %v2521 = vpop.f32.mrf.mxu0
        %v2522 = vadd.f32 %v2509, %v2521
        %v2523 = vpop.f32.mrf.mxu0
        %2524 = vdwg.mxu0
        %2525 = vmatpush.bf16.msra.mxu0 %v2010
        %2526 = vmatpush.bf16.msra.mxu0 %v2009
        %2527 = vmatpush.bf16.msra.mxu0 %v2008
        %2528 = vmatpush.bf16.msra.mxu0 %v2007
        %2529 = vmatpush.bf16.msra.mxu0 %v2006
        %2530 = vmatpush.bf16.msra.mxu0 %v2005
        %2531 = vmatpush.bf16.msra.mxu0 %v2004
        %2532 = vmatpush.bf16.msra.mxu0 %v2003
        %2533 = vmatmul.bf16.gmra.mxu0 %v421
        %v2534 = vpop.f32.mrf.mxu0
        %v2535 = vadd.f32 %v2522, %v2534
        %v2536 = vpop.f32.mrf.mxu0
        %2537 = vdwg.mxu0
        %2538 = vmatpush.bf16.msra.mxu0 %v2018
        %2539 = vmatpush.bf16.msra.mxu0 %v2017
        %2540 = vmatpush.bf16.msra.mxu0 %v2016
        %2541 = vmatpush.bf16.msra.mxu0 %v2015
        %2542 = vmatpush.bf16.msra.mxu0 %v2014
        %2543 = vmatpush.bf16.msra.mxu0 %v2013
        %2544 = vmatpush.bf16.msra.mxu0 %v2012
        %2545 = vmatpush.bf16.msra.mxu0 %v2011
        %2546 = vmatmul.bf16.gmra.mxu0 %v422
        %v2547 = vpop.f32.mrf.mxu0
        %v2548 = vadd.f32 %v2535, %v2547
        %v2549 = vpop.f32.mrf.mxu0
        %2550 = vdwg.mxu0
        %2551 = vmatpush.bf16.msra.mxu0 %v2026
        %2552 = vmatpush.bf16.msra.mxu0 %v2025
        %2553 = vmatpush.bf16.msra.mxu0 %v2024
        %2554 = vmatpush.bf16.msra.mxu0 %v2023
        %2555 = vmatpush.bf16.msra.mxu0 %v2022
        %2556 = vmatpush.bf16.msra.mxu0 %v2021
        %2557 = vmatpush.bf16.msra.mxu0 %v2020
        %2558 = vmatpush.bf16.msra.mxu0 %v2019
        %2559 = vmatmul.bf16.gmra.mxu0 %v423
        %v2560 = vpop.f32.mrf.mxu0
        %v2561 = vadd.f32 %v2548, %v2560
        %v2562 = vpop.f32.mrf.mxu0
        %2563 = vdwg.mxu0
        %2564 = vmatpush.bf16.msra.mxu0 %v2034
        %2565 = vmatpush.bf16.msra.mxu0 %v2033
        %2566 = vmatpush.bf16.msra.mxu0 %v2032
        %2567 = vmatpush.bf16.msra.mxu0 %v2031
        %2568 = vmatpush.bf16.msra.mxu0 %v2030
        %2569 = vmatpush.bf16.msra.mxu0 %v2029
        %2570 = vmatpush.bf16.msra.mxu0 %v2028
        %2571 = vmatpush.bf16.msra.mxu0 %v2027
        %2572 = vmatmul.bf16.gmra.mxu0 %v424
        %v2573 = vpop.f32.mrf.mxu0
        %v2574 = vadd.f32 %v2561, %v2573
        %v2575 = vpop.f32.mrf.mxu0
        %2576 = vdwg.mxu0
        %2577 = vmatpush.bf16.msra.mxu0 %v2042
        %2578 = vmatpush.bf16.msra.mxu0 %v2041
        %2579 = vmatpush.bf16.msra.mxu0 %v2040
        %2580 = vmatpush.bf16.msra.mxu0 %v2039
        %2581 = vmatpush.bf16.msra.mxu0 %v2038
        %2582 = vmatpush.bf16.msra.mxu0 %v2037
        %2583 = vmatpush.bf16.msra.mxu0 %v2036
        %2584 = vmatpush.bf16.msra.mxu0 %v2035
        %2585 = vmatmul.bf16.gmra.mxu0 %v425
        %v2586 = vpop.f32.mrf.mxu0
        %v2587 = vadd.f32 %v2574, %v2586
        %v2588 = vpop.f32.mrf.mxu0
        %2589 = vdwg.mxu0
        %2590 = vmatpush.bf16.msra.mxu0 %v2050
        %2591 = vmatpush.bf16.msra.mxu0 %v2049
        %2592 = vmatpush.bf16.msra.mxu0 %v2048
        %2593 = vmatpush.bf16.msra.mxu0 %v2047
        %2594 = vmatpush.bf16.msra.mxu0 %v2046
        %2595 = vmatpush.bf16.msra.mxu0 %v2045
        %2596 = vmatpush.bf16.msra.mxu0 %v2044
        %2597 = vmatpush.bf16.msra.mxu0 %v2043
        %2598 = vmatmul.bf16.gmra.mxu0 %v426
        %v2599 = vpop.f32.mrf.mxu0
        %v2600 = vadd.f32 %v2587, %v2599
        %v2601 = vpop.f32.mrf.mxu0
        %2602 = vdwg.mxu0
        %2603 = vmatpush.bf16.msra.mxu0 %v2058
        %2604 = vmatpush.bf16.msra.mxu0 %v2057
        %2605 = vmatpush.bf16.msra.mxu0 %v2056
        %2606 = vmatpush.bf16.msra.mxu0 %v2055
        %2607 = vmatpush.bf16.msra.mxu0 %v2054
        %2608 = vmatpush.bf16.msra.mxu0 %v2053
        %2609 = vmatpush.bf16.msra.mxu0 %v2052
        %2610 = vmatpush.bf16.msra.mxu0 %v2051
        %2611 = vmatmul.bf16.gmra.mxu0 %v427
        %v2612 = vpop.f32.mrf.mxu0
        %v2613 = vadd.f32 %v2600, %v2612
        %v2614 = vpop.f32.mrf.mxu0
        %2615 = vdwg.mxu0
        %2616 = vmatpush.bf16.msra.mxu0 %v2066
        %2617 = vmatpush.bf16.msra.mxu0 %v2065
        %2618 = vmatpush.bf16.msra.mxu0 %v2064
        %2619 = vmatpush.bf16.msra.mxu0 %v2063
        %2620 = vmatpush.bf16.msra.mxu0 %v2062
        %2621 = vmatpush.bf16.msra.mxu0 %v2061
        %2622 = vmatpush.bf16.msra.mxu0 %v2060
        %2623 = vmatpush.bf16.msra.mxu0 %v2059
        %2624 = vmatmul.bf16.gmra.mxu0 %v428
        %v2625 = vpop.f32.mrf.mxu0
        %v2626 = vadd.f32 %v2613, %v2625
        %v2627 = vpop.f32.mrf.mxu0
        %2628 = vdwg.mxu0
        %2629 = vmatpush.bf16.msra.mxu0 %v2074
        %2630 = vmatpush.bf16.msra.mxu0 %v2073
        %2631 = vmatpush.bf16.msra.mxu0 %v2072
        %2632 = vmatpush.bf16.msra.mxu0 %v2071
        %2633 = vmatpush.bf16.msra.mxu0 %v2070
        %2634 = vmatpush.bf16.msra.mxu0 %v2069
        %2635 = vmatpush.bf16.msra.mxu0 %v2068
        %2636 = vmatpush.bf16.msra.mxu0 %v2067
        %2637 = vmatmul.bf16.gmra.mxu0 %v429
        %v2638 = vpop.f32.mrf.mxu0
        %v2639 = vadd.f32 %v2626, %v2638
        %v2640 = vpop.f32.mrf.mxu0
        %2641 = vdwg.mxu0
        %2642 = vmatpush.bf16.msra.mxu0 %v2082
        %2643 = vmatpush.bf16.msra.mxu0 %v2081
        %2644 = vmatpush.bf16.msra.mxu0 %v2080
        %2645 = vmatpush.bf16.msra.mxu0 %v2079
        %2646 = vmatpush.bf16.msra.mxu0 %v2078
        %2647 = vmatpush.bf16.msra.mxu0 %v2077
        %2648 = vmatpush.bf16.msra.mxu0 %v2076
        %2649 = vmatpush.bf16.msra.mxu0 %v2075
        %2650 = vmatmul.bf16.gmra.mxu0 %v430
        %v2651 = vpop.f32.mrf.mxu0
        %v2652 = vadd.f32 %v2639, %v2651
        %v2653 = vpop.f32.mrf.mxu0
        %2654 = vdwg.mxu0
        %2655 = vmatpush.bf16.msra.mxu0 %v2090
        %2656 = vmatpush.bf16.msra.mxu0 %v2089
        %2657 = vmatpush.bf16.msra.mxu0 %v2088
        %2658 = vmatpush.bf16.msra.mxu0 %v2087
        %2659 = vmatpush.bf16.msra.mxu0 %v2086
        %2660 = vmatpush.bf16.msra.mxu0 %v2085
        %2661 = vmatpush.bf16.msra.mxu0 %v2084
        %2662 = vmatpush.bf16.msra.mxu0 %v2083
        %2663 = vmatmul.bf16.gmra.mxu0 %v431
        %v2664 = vpop.f32.mrf.mxu0
        %v2665 = vadd.f32 %v2652, %v2664
        %v2666 = vpop.f32.mrf.mxu0
        %2667 = vdwg.mxu0
        %2668 = vmatpush.bf16.msra.mxu0 %v2098
        %2669 = vmatpush.bf16.msra.mxu0 %v2097
        %2670 = vmatpush.bf16.msra.mxu0 %v2096
        %2671 = vmatpush.bf16.msra.mxu0 %v2095
        %2672 = vmatpush.bf16.msra.mxu0 %v2094
        %2673 = vmatpush.bf16.msra.mxu0 %v2093
        %2674 = vmatpush.bf16.msra.mxu0 %v2092
        %2675 = vmatpush.bf16.msra.mxu0 %v2091
        %2676 = vmatmul.bf16.gmra.mxu0 %v432
        %v2677 = vpop.f32.mrf.mxu0
        %v2678 = vadd.f32 %v2665, %v2677
        %v2679 = vpop.f32.mrf.mxu0
        %2680 = vdwg.mxu0
        %2681 = vmatpush.bf16.msra.mxu0 %v2106
        %2682 = vmatpush.bf16.msra.mxu0 %v2105
        %2683 = vmatpush.bf16.msra.mxu0 %v2104
        %2684 = vmatpush.bf16.msra.mxu0 %v2103
        %2685 = vmatpush.bf16.msra.mxu0 %v2102
        %2686 = vmatpush.bf16.msra.mxu0 %v2101
        %2687 = vmatpush.bf16.msra.mxu0 %v2100
        %2688 = vmatpush.bf16.msra.mxu0 %v2099
        %2689 = vmatmul.bf16.gmra.mxu0 %v433
        %v2690 = vpop.f32.mrf.mxu0
        %v2691 = vadd.f32 %v2678, %v2690
        %v2692 = vpop.f32.mrf.mxu0
        %2693 = vdwg.mxu0
        %2694 = vmatpush.bf16.msra.mxu0 %v2114
        %2695 = vmatpush.bf16.msra.mxu0 %v2113
        %2696 = vmatpush.bf16.msra.mxu0 %v2112
        %2697 = vmatpush.bf16.msra.mxu0 %v2111
        %2698 = vmatpush.bf16.msra.mxu0 %v2110
        %2699 = vmatpush.bf16.msra.mxu0 %v2109
        %2700 = vmatpush.bf16.msra.mxu0 %v2108
        %2701 = vmatpush.bf16.msra.mxu0 %v2107
        %2702 = vmatmul.bf16.gmra.mxu0 %v434
        %v2703 = vpop.f32.mrf.mxu0
        %v2704 = vadd.f32 %v2691, %v2703
        %v2705 = vpop.f32.mrf.mxu0
        %2706 = vdwg.mxu0
        %2707 = vmatpush.bf16.msra.mxu0 %v2122
        %2708 = vmatpush.bf16.msra.mxu0 %v2121
        %2709 = vmatpush.bf16.msra.mxu0 %v2120
        %2710 = vmatpush.bf16.msra.mxu0 %v2119
        %2711 = vmatpush.bf16.msra.mxu0 %v2118
        %2712 = vmatpush.bf16.msra.mxu0 %v2117
        %2713 = vmatpush.bf16.msra.mxu0 %v2116
        %2714 = vmatpush.bf16.msra.mxu0 %v2115
        %2715 = vmatmul.bf16.gmra.mxu0 %v435
        %v2716 = vpop.f32.mrf.mxu0
        %v2717 = vadd.f32 %v2704, %v2716
        %v2718 = vpop.f32.mrf.mxu0
        %2719 = vdwg.mxu0
        %2720 = vmatpush.bf16.msra.mxu0 %v2130
        %2721 = vmatpush.bf16.msra.mxu0 %v2129
        %2722 = vmatpush.bf16.msra.mxu0 %v2128
        %2723 = vmatpush.bf16.msra.mxu0 %v2127
        %2724 = vmatpush.bf16.msra.mxu0 %v2126
        %2725 = vmatpush.bf16.msra.mxu0 %v2125
        %2726 = vmatpush.bf16.msra.mxu0 %v2124
        %2727 = vmatpush.bf16.msra.mxu0 %v2123
        %2728 = vmatmul.bf16.gmra.mxu0 %v436
        %v2729 = vpop.f32.mrf.mxu0
        %v2730 = vadd.f32 %v2717, %v2729
        %v2731 = vpop.f32.mrf.mxu0
        %2732 = vdwg.mxu0
        %2733 = vmatpush.bf16.msra.mxu0 %v2138
        %2734 = vmatpush.bf16.msra.mxu0 %v2137
        %2735 = vmatpush.bf16.msra.mxu0 %v2136
        %2736 = vmatpush.bf16.msra.mxu0 %v2135
        %2737 = vmatpush.bf16.msra.mxu0 %v2134
        %2738 = vmatpush.bf16.msra.mxu0 %v2133
        %2739 = vmatpush.bf16.msra.mxu0 %v2132
        %2740 = vmatpush.bf16.msra.mxu0 %v2131
        %2741 = vmatmul.bf16.gmra.mxu0 %v437
        %v2742 = vpop.f32.mrf.mxu0
        %v2743 = vadd.f32 %v2730, %v2742
        %v2744 = vpop.f32.mrf.mxu0
        %2745 = vdwg.mxu0
        %2746 = vmatpush.bf16.msra.mxu0 %v2146
        %2747 = vmatpush.bf16.msra.mxu0 %v2145
        %2748 = vmatpush.bf16.msra.mxu0 %v2144
        %2749 = vmatpush.bf16.msra.mxu0 %v2143
        %2750 = vmatpush.bf16.msra.mxu0 %v2142
        %2751 = vmatpush.bf16.msra.mxu0 %v2141
        %2752 = vmatpush.bf16.msra.mxu0 %v2140
        %2753 = vmatpush.bf16.msra.mxu0 %v2139
        %2754 = vmatmul.bf16.gmra.mxu0 %v438
        %v2755 = vpop.f32.mrf.mxu0
        %v2756 = vadd.f32 %v2743, %v2755
        %v2757 = vpop.f32.mrf.mxu0
        %2758 = vdwg.mxu0
        %2759 = vmatpush.bf16.msra.mxu0 %v2154
        %2760 = vmatpush.bf16.msra.mxu0 %v2153
        %2761 = vmatpush.bf16.msra.mxu0 %v2152
        %2762 = vmatpush.bf16.msra.mxu0 %v2151
        %2763 = vmatpush.bf16.msra.mxu0 %v2150
        %2764 = vmatpush.bf16.msra.mxu0 %v2149
        %2765 = vmatpush.bf16.msra.mxu0 %v2148
        %2766 = vmatpush.bf16.msra.mxu0 %v2147
        %2767 = vmatmul.bf16.gmra.mxu0 %v439
        %v2768 = vpop.f32.mrf.mxu0
        %v2769 = vadd.f32 %v2756, %v2768
        %v2770 = vpop.f32.mrf.mxu0
        %2771 = vdwg.mxu0
        %2772 = vmatpush.bf16.msra.mxu0 %v2162
        %2773 = vmatpush.bf16.msra.mxu0 %v2161
        %2774 = vmatpush.bf16.msra.mxu0 %v2160
        %2775 = vmatpush.bf16.msra.mxu0 %v2159
        %2776 = vmatpush.bf16.msra.mxu0 %v2158
        %2777 = vmatpush.bf16.msra.mxu0 %v2157
        %2778 = vmatpush.bf16.msra.mxu0 %v2156
        %2779 = vmatpush.bf16.msra.mxu0 %v2155
        %2780 = vmatmul.bf16.gmra.mxu0 %v440
        %v2781 = vpop.f32.mrf.mxu0
        %v2782 = vadd.f32 %v2769, %v2781
        %v2783 = vpop.f32.mrf.mxu0
        %2784 = vdwg.mxu0
        %2785 = vmatpush.bf16.msra.mxu0 %v2170
        %2786 = vmatpush.bf16.msra.mxu0 %v2169
        %2787 = vmatpush.bf16.msra.mxu0 %v2168
        %2788 = vmatpush.bf16.msra.mxu0 %v2167
        %2789 = vmatpush.bf16.msra.mxu0 %v2166
        %2790 = vmatpush.bf16.msra.mxu0 %v2165
        %2791 = vmatpush.bf16.msra.mxu0 %v2164
        %2792 = vmatpush.bf16.msra.mxu0 %v2163
        %2793 = vmatmul.bf16.gmra.mxu0 %v441
        %v2794 = vpop.f32.mrf.mxu0
        %v2795 = vadd.f32 %v2782, %v2794
        %v2796 = vpop.f32.mrf.mxu0
        %2797 = vdwg.mxu0
        %2798 = vmatpush.bf16.msra.mxu0 %v2178
        %2799 = vmatpush.bf16.msra.mxu0 %v2177
        %2800 = vmatpush.bf16.msra.mxu0 %v2176
        %2801 = vmatpush.bf16.msra.mxu0 %v2175
        %2802 = vmatpush.bf16.msra.mxu0 %v2174
        %2803 = vmatpush.bf16.msra.mxu0 %v2173
        %2804 = vmatpush.bf16.msra.mxu0 %v2172
        %2805 = vmatpush.bf16.msra.mxu0 %v2171
        %2806 = vmatmul.bf16.gmra.mxu0 %v442
        %v2807 = vpop.f32.mrf.mxu0
        %v2808 = vadd.f32 %v2795, %v2807
        %v2809 = vpop.f32.mrf.mxu0
        %2810 = vdwg.mxu0
        %2811 = vmatpush.bf16.msra.mxu0 %v2186
        %2812 = vmatpush.bf16.msra.mxu0 %v2185
        %2813 = vmatpush.bf16.msra.mxu0 %v2184
        %2814 = vmatpush.bf16.msra.mxu0 %v2183
        %2815 = vmatpush.bf16.msra.mxu0 %v2182
        %2816 = vmatpush.bf16.msra.mxu0 %v2181
        %2817 = vmatpush.bf16.msra.mxu0 %v2180
        %2818 = vmatpush.bf16.msra.mxu0 %v2179
        %2819 = vmatmul.bf16.gmra.mxu0 %v443
        %v2820 = vpop.f32.mrf.mxu0
        %v2821 = vadd.f32 %v2808, %v2820
        %v2822 = vpop.f32.mrf.mxu0
        %2823 = vdwg.mxu0
        %2824 = vmatpush.bf16.msra.mxu0 %v2194
        %2825 = vmatpush.bf16.msra.mxu0 %v2193
        %2826 = vmatpush.bf16.msra.mxu0 %v2192
        %2827 = vmatpush.bf16.msra.mxu0 %v2191
        %2828 = vmatpush.bf16.msra.mxu0 %v2190
        %2829 = vmatpush.bf16.msra.mxu0 %v2189
        %2830 = vmatpush.bf16.msra.mxu0 %v2188
        %2831 = vmatpush.bf16.msra.mxu0 %v2187
        %2832 = vmatmul.bf16.gmra.mxu0 %v444
        %v2833 = vpop.f32.mrf.mxu0
        %v2834 = vadd.f32 %v2821, %v2833
        %v2835 = vpop.f32.mrf.mxu0
        %2836 = vdwg.mxu0
        %2837 = vmatpush.bf16.msra.mxu0 %v2202
        %2838 = vmatpush.bf16.msra.mxu0 %v2201
        %2839 = vmatpush.bf16.msra.mxu0 %v2200
        %2840 = vmatpush.bf16.msra.mxu0 %v2199
        %2841 = vmatpush.bf16.msra.mxu0 %v2198
        %2842 = vmatpush.bf16.msra.mxu0 %v2197
        %2843 = vmatpush.bf16.msra.mxu0 %v2196
        %2844 = vmatpush.bf16.msra.mxu0 %v2195
        %2845 = vmatmul.bf16.gmra.mxu0 %v445
        %v2846 = vpop.f32.mrf.mxu0
        %v2847 = vadd.f32 %v2834, %v2846
        %v2848 = vpop.f32.mrf.mxu0
        %2849 = vdwg.mxu0
        %2850 = vmatpush.bf16.msra.mxu0 %v2210
        %2851 = vmatpush.bf16.msra.mxu0 %v2209
        %2852 = vmatpush.bf16.msra.mxu0 %v2208
        %2853 = vmatpush.bf16.msra.mxu0 %v2207
        %2854 = vmatpush.bf16.msra.mxu0 %v2206
        %2855 = vmatpush.bf16.msra.mxu0 %v2205
        %2856 = vmatpush.bf16.msra.mxu0 %v2204
        %2857 = vmatpush.bf16.msra.mxu0 %v2203
        %2858 = vmatmul.bf16.gmra.mxu0 %v446
        %v2859 = vpop.f32.mrf.mxu0
        %v2860 = vadd.f32 %v2847, %v2859
        %v2861 = vpop.f32.mrf.mxu0
        %2862 = vdwg.mxu0
        %2863 = vmatpush.bf16.msra.mxu0 %v2218
        %2864 = vmatpush.bf16.msra.mxu0 %v2217
        %2865 = vmatpush.bf16.msra.mxu0 %v2216
        %2866 = vmatpush.bf16.msra.mxu0 %v2215
        %2867 = vmatpush.bf16.msra.mxu0 %v2214
        %2868 = vmatpush.bf16.msra.mxu0 %v2213
        %2869 = vmatpush.bf16.msra.mxu0 %v2212
        %2870 = vmatpush.bf16.msra.mxu0 %v2211
        %2871 = vmatmul.bf16.gmra.mxu0 %v447
        %v2872 = vpop.f32.mrf.mxu0
        %v2873 = vadd.f32 %v2860, %v2872
        %v2874 = vpop.f32.mrf.mxu0
        %2875 = vdwg.mxu0
        %2876 = vmatpush.bf16.msra.mxu0 %v2226
        %2877 = vmatpush.bf16.msra.mxu0 %v2225
        %2878 = vmatpush.bf16.msra.mxu0 %v2224
        %2879 = vmatpush.bf16.msra.mxu0 %v2223
        %2880 = vmatpush.bf16.msra.mxu0 %v2222
        %2881 = vmatpush.bf16.msra.mxu0 %v2221
        %2882 = vmatpush.bf16.msra.mxu0 %v2220
        %2883 = vmatpush.bf16.msra.mxu0 %v2219
        %2884 = vmatmul.bf16.gmra.mxu0 %v448
        %v2885 = vpop.f32.mrf.mxu0
        %v2886 = vadd.f32 %v2873, %v2885
        %v2887 = vpop.f32.mrf.mxu0
        %2888 = vdwg.mxu0
        %2889 = vmatpush.bf16.msra.mxu0 %v2234
        %2890 = vmatpush.bf16.msra.mxu0 %v2233
        %2891 = vmatpush.bf16.msra.mxu0 %v2232
        %2892 = vmatpush.bf16.msra.mxu0 %v2231
        %2893 = vmatpush.bf16.msra.mxu0 %v2230
        %2894 = vmatpush.bf16.msra.mxu0 %v2229
        %2895 = vmatpush.bf16.msra.mxu0 %v2228
        %2896 = vmatpush.bf16.msra.mxu0 %v2227
        %2897 = vmatmul.bf16.gmra.mxu0 %v449
        %v2898 = vpop.f32.mrf.mxu0
        %v2899 = vadd.f32 %v2886, %v2898
        %v2900 = vpop.f32.mrf.mxu0
        %2901 = vdwg.mxu0
        %2902 = vmatpush.bf16.msra.mxu0 %v2242
        %2903 = vmatpush.bf16.msra.mxu0 %v2241
        %2904 = vmatpush.bf16.msra.mxu0 %v2240
        %2905 = vmatpush.bf16.msra.mxu0 %v2239
        %2906 = vmatpush.bf16.msra.mxu0 %v2238
        %2907 = vmatpush.bf16.msra.mxu0 %v2237
        %2908 = vmatpush.bf16.msra.mxu0 %v2236
        %2909 = vmatpush.bf16.msra.mxu0 %v2235
        %2910 = vmatmul.bf16.gmra.mxu0 %v450
        %v2911 = vpop.f32.mrf.mxu0
        %v2912 = vadd.f32 %v2899, %v2911
        %v2913 = vpop.f32.mrf.mxu0
        %2914 = vdwg.mxu0
        %v2915 = vadd.f32 %v329, %v2912
        %2916 = vst [vmem:[#allocation2] sm:$0x3] %v2915
        // Predicated region
        $region53: #{video_classifier_forward.1} parent=35 // pred_check
          %p2917 = pneg %p324
        $region54: #{video_classifier_forward.1} parent=35 // pred_check_branch
          %2919 = sbr.rel (%p2917) target = $region56
        $region55: #{video_classifier_forward.1} parent=35 // pred_region
          %v2920 = vld [vmem:[#allocation2] sm:$0x3]
          %v2921 = vld [vmem:[#allocation5] sm:$0xff]
          %v2922 = vld [vmem:[#allocation5 + $0x8] sm:$0xff]
          %v2923 = vld [vmem:[#allocation5 + $0x10] sm:$0xff]
          %v2924 = vld [vmem:[#allocation5 + $0x18] sm:$0xff]
          %v2925 = vld [vmem:[#allocation5 + $0x20] sm:$0xff]
          %v2926 = vld [vmem:[#allocation5 + $0x28] sm:$0xff]
          %v2927 = vld [vmem:[#allocation5 + $0x30] sm:$0xff]
          %v2928 = vld [vmem:[#allocation5 + $0x38] sm:$0xff]
          %v2929 = vld [vmem:[#allocation5 + $0x40] sm:$0xff]
          %v2930 = vld [vmem:[#allocation5 + $0x48] sm:$0xff]
          %v2931 = vld [vmem:[#allocation5 + $0x50] sm:$0xff]
          %v2932 = vld [vmem:[#allocation5 + $0x58] sm:$0xff]
          %v2933 = vld [vmem:[#allocation5 + $0x60] sm:$0xff]
          %v2934 = vld [vmem:[#allocation5 + $0x68] sm:$0xff]
          %v2935 = vld [vmem:[#allocation5 + $0x70] sm:$0xff]
          %v2936 = vld [vmem:[#allocation5 + $0x78] sm:$0xff]
          %v2937 = vld [vmem:[#allocation7] sm:$0x1]
          %v2938 = vmul.f32 %v2937, 0.5
          %v2940 = vperm.slane %v2938, 0
          %2942 = vmatpush.msra.mxu0 %v2936
          %2943 = vmatpush.msra.mxu0 %v2935
          %2944 = vmatpush.msra.mxu0 %v2934
          %2945 = vmatpush.msra.mxu0 %v2933
          %2946 = vmatpush.msra.mxu0 %v2932
          %2947 = vmatpush.msra.mxu0 %v2931
          %2948 = vmatpush.msra.mxu0 %v2930
          %2949 = vmatpush.msra.mxu0 %v2929
          %2950 = vmatpush.msra.mxu0 %v2928
          %2951 = vmatpush.msra.mxu0 %v2927
          %2952 = vmatpush.msra.mxu0 %v2926
          %2953 = vmatpush.msra.mxu0 %v2925
          %2954 = vmatpush.msra.mxu0 %v2924
          %2955 = vmatpush.msra.mxu0 %v2923
          %2956 = vmatpush.msra.mxu0 %v2922
          %2957 = vmatpush.msra.mxu0 %v2921
          %2958 = vmatmul.f32.gmra.mxu0 %v2920
          %v2959 = vpop.f32.mrf.mxu0
          %v2960 = vadd.f32 %v2940, %v2959
          %2961 = vdwg.mxu0
          %2962 = vst [vmem:[%s323] sm:$0x3] %v2960
        $region56: #{video_classifier_forward.1} parent=35 // pred_fallthru
          _
        %p2963 = scmp.lt.s32.totalorder %s24, 1
        %s2964 = scalar_select %p2963, %s24, 1
        %p2965 = scmp.lt.s32.totalorder %s25, 0
        %s2966 = scalar_select %p2965, %s25, 0
        %s2967 = sadd.s32 %s2966, %s2964
        %s2968 = smul.addr %s2967, 2
        %s2969 = scalar_lea.vmem %s4, %s2968
        // Predicated region
        $region57: #{video_classifier_forward.1} parent=35 // pred_check
          %p2970 = pneg %p158
        $region58: #{video_classifier_forward.1} parent=35 // pred_check_branch
          %2972 = sbr.rel (%p2970) target = $region60
        $region59: #{video_classifier_forward.1} parent=35 // pred_region
          _
        $region60: #{video_classifier_forward.1} parent=35 // pred_fallthru
          _
      $region36: #{video_classifier_forward.1} parent=5 // pred_fallthru
        _
      %p2973 = scmp.le.s32.totalorder 2, %s14
      // Predicated region
      $region61: #{video_classifier_forward.1} parent=5 // pred_check
        %p2974 = pneg %p2973
      $region62: #{video_classifier_forward.1} parent=5 // pred_check_branch
        %2976 = sbr.rel (%p2974) target = $region64
      $region63: #{video_classifier_forward.1} parent=5 // pred_region
        %s2977 = ssub.s32 %s14, 2
        // Predicated region
        $region65: #{video_classifier_forward.1} parent=63 // pred_check
          %p2978 = pneg %p164
        $region66: #{video_classifier_forward.1} parent=63 // pred_check_branch
          %2980 = sbr.rel (%p2978) target = $region68
        $region67: #{video_classifier_forward.1} parent=63 // pred_region
          %p2981 = scmp.lt.s32.totalorder %s27, 1
          %s2982 = scalar_select %p2981, %s27, 1
          %p2983 = scmp.lt.s32.totalorder %s28, 0
          %s2984 = scalar_select %p2983, %s28, 0
          %s2985 = sadd.s32 %s2984, %s2982
          %s2986 = smul.addr %s2985, 2
          %s2987 = scalar_lea.vmem %s4, %s2986
        $region68: #{video_classifier_forward.1} parent=63 // pred_fallthru
          _
      $region64: #{video_classifier_forward.1} parent=5 // pred_fallthru
        _
    $region6: #{video_classifier_forward.1} parent=1 // loop_footer
      %s18 = sadd.s32 1, %s14
    $region7: #{video_classifier_forward.1} parent=1 // loop_footer_branch
      %13 = sbr.rel target = $region3
    $region8: #{video_classifier_forward.1} parent=1 // loop_exit
      _
    %2988 = vsyncpa [#allocation4], 1
    %s2989 = scalar_lea.sflag [#allocation4], 1
    %2990 = vsyncpa %s2989, 1
    %2991 = vsyncpa [#allocation6], 1

</llo_original>
